<compile_context>
chip_gen: v6e
topology: v6e:2x2x1
jax: 0.10.0
libtpu: 0.0.40
codegen_flags: <defaults>
</compile_context>

<pallas_src>
import jax
import jax.numpy as jnp
from jax import lax
from jax.experimental import pallas as pl
from jax.experimental.pallas import tpu as pltpu


def _round_up(v, m):
    return ((v + m - 1) // m) * m


def gru_fc_kernel(x_ref, h0_ref, wi_ref, wh_ref, bi_ref, bh_ref, wfc_ref, bfc_ref,
                  out_ref, hs_ref, gi_ref):
    SB = x_ref.shape[0]            # S * BP
    BP, HP = h0_ref.shape          # batch padded to sublane width, hidden padded to lane width
    S = SB // BP
    G3 = wi_ref.shape[1]           # 3 * HP (lane-aligned gate blocks)

    # ---- Prologue: batched input projection for all timesteps (no h dependence).
    #      One bf16 MXU matmul, staged into VMEM scratch for aligned per-step loads.
    gi_ref[...] = (jnp.dot(x_ref[...], wi_ref[...],
                           preferred_element_type=jnp.float32) + bi_ref[...])

    # Hoisted once: fused bf16 hidden-side weight and pre-broadcast hidden bias.
    wh = wh_ref[...]                                              # (HP, 3*HP) bf16
    bh = jnp.broadcast_to(bh_ref[...], (BP, G3))                  # (BP, 3*HP) f32

    # ---- Recurrence: fully unrolled static time loop (S is small); h carried in
    #      f32 vregs, MXU operands in bf16 (single pass per step on the serial chain).
    # TODO(synk): for S in the hundreds, switch to lax.fori_loop(unroll~4-8) with
    #             pl.multiple_of'd pl.ds offsets to cap instruction memory.
    h = h0_ref[...]                                               # (BP, HP) f32
    for t in range(S):
        gi = gi_ref[t * BP:(t + 1) * BP, :]                       # aligned (BP, 3*HP) load
        gh = jnp.dot(h.astype(jnp.bfloat16), wh,
                     preferred_element_type=jnp.float32) + bh     # (BP, 3*HP)

        # PyTorch GRU gate order (r, z, n); b_hn stays inside the r-gated term.
        # Single fused sigmoid over the lane-aligned (r|z) block.
        rz = jax.nn.sigmoid(gi[:, :2 * HP] + gh[:, :2 * HP])
        r = rz[:, :HP]
        z = rz[:, HP:]
        n = jnp.tanh(gi[:, 2 * HP:] + r * gh[:, 2 * HP:])
        h = (1.0 - z) * n + z * h

        # Aligned full-tile store into the VMEM-resident output ref
        # (single HBM writeback after the kernel body finishes).
        hs_ref[t * BP:(t + 1) * BP, :] = h

    # ---- Epilogue: FC head over all timesteps in one bf16 matmul + one bulk store.
    y = jnp.dot(hs_ref[...].astype(jnp.bfloat16), wfc_ref[...],
                preferred_element_type=jnp.float32) + bfc_ref[...]
    out_ref[...] = y.astype(out_ref.dtype)


def rnn_forward(x, params):
    """x: (S, B, I) float32.  Returns (out (S,B,O), hidden_states (S,B,H))."""
    S, B, I = x.shape
    H = params["w_ir"].shape[1]
    O = params["w_fc"].shape[1]

    BP = _round_up(B, 8)      # sublane width: per-step tiles become full (8, .) tiles
    HP = _round_up(H, 128)    # lane width: each gate occupies whole 128-lane vregs
    G3 = 3 * HP

    f32, bf16 = jnp.float32, jnp.bfloat16

    def pad_cols(a, width):
        return jnp.pad(a.astype(f32), ((0, 0), (0, width - a.shape[1])))

    def pad_rows_cols(a, rows, cols):
        return jnp.pad(a.astype(f32), ((0, rows - a.shape[0]), (0, cols - a.shape[1])))

    # Fused, lane-aligned gate weights/biases: gate g lives at lanes [g*HP, g*HP + H).
    wi = jnp.concatenate([pad_cols(params["w_ir"], HP),
                          pad_cols(params["w_iz"], HP),
                          pad_cols(params["w_in"], HP)], axis=1).astype(bf16)       # (I, 3HP)
    wh = jnp.concatenate([pad_rows_cols(params["w_hr"], HP, HP),
                          pad_rows_cols(params["w_hz"], HP, HP),
                          pad_rows_cols(params["w_hn"], HP, HP)], axis=1).astype(bf16)  # (HP, 3HP)
    bi = jnp.concatenate([pad_cols(params["b_ir"], HP),
                          pad_cols(params["b_iz"], HP),
                          pad_cols(params["b_in"], HP)], axis=1)                    # (1, 3HP) f32
    bh = jnp.concatenate([pad_cols(params["b_hr"], HP),
                          pad_cols(params["b_hz"], HP),
                          pad_cols(params["b_hn"], HP)], axis=1)                    # (1, 3HP) f32
    wfc = jnp.pad(params["w_fc"].astype(f32), ((0, HP - H), (0, 0))).astype(bf16)   # (HP, O)
    bfc = params["b_fc"].astype(f32)                                                # (1, O)

    # h0 is a (num_layers, H) parameter; PyTorch repeats it across batch.
    h0 = jnp.broadcast_to(params["h0"][0], (BP, H)).astype(f32)
    h0 = jnp.pad(h0, ((0, 0), (0, HP - H)))                                         # (BP, HP)

    # Flatten time into groups of BP sublane-aligned rows; bf16 MXU operand.
    x2 = jnp.pad(x.astype(f32), ((0, 0), (0, BP - B), (0, 0)))
    x2 = x2.reshape(S * BP, I).astype(bf16)

    # NOTE: last dim of `out` (O) is narrow; if O or S*B ever grows, pad O to 128
    # lanes here and slice back outside (lane-dense out_spec lever).
    vmem = pl.BlockSpec(memory_space=pltpu.MemorySpace.VMEM)
    out2, hs2 = pl.pallas_call(
        gru_fc_kernel,
        out_shape=(
            jax.ShapeDtypeStruct((S * BP, O), f32),
            jax.ShapeDtypeStruct((S * BP, HP), f32),
        ),
        in_specs=[vmem] * 8,          # everything is tiny; whole arrays live in VMEM
        out_specs=(vmem, vmem),
        scratch_shapes=[pltpu.VMEM((S * BP, G3), f32)],
        compiler_params=pltpu.CompilerParams(vmem_limit_bytes=32 * 1024 * 1024),
    )(x2, h0, wi, wh, bi, bh, wfc, bfc)

    out = out2.reshape(S, BP, O)[:, :B, :]
    hs = hs2.reshape(S, BP, HP)[:, :B, :H]
    return out, hs


def rnn_reference(x, params):
    """Pure-JAX f32 reference (lax.scan GRU with un-fused per-gate weights)."""
    S, B, I = x.shape
    H = params["w_ir"].shape[1]
    h0 = jnp.broadcast_to(params["h0"][0], (B, H)).astype(jnp.float32)

    def step(h, x_t):
        gi_r = x_t @ params["w_ir"] + params["b_ir"]
        gi_z = x_t @ params["w_iz"] + params["b_iz"]
        gi_n = x_t @ params["w_in"] + params["b_in"]
        gh_r = h @ params["w_hr"] + params["b_hr"]
        gh_z = h @ params["w_hz"] + params["b_hz"]
        gh_n = h @ params["w_hn"] + params["b_hn"]
        r = jax.nn.sigmoid(gi_r + gh_r)
        z = jax.nn.sigmoid(gi_z + gh_z)
        n = jnp.tanh(gi_n + r * gh_n)
        h_new = (1.0 - z) * n + z * h
        return h_new, h_new

    _, hs = lax.scan(step, h0, x)
    out = hs @ params["w_fc"] + params["b_fc"]
    return out, hs


def init_params(key, input_size, hidden_size, output_size, num_layers=1):
    """Deterministic init mimicking PyTorch default uniform(-1/sqrt(H), 1/sqrt(H))."""
    H, I, O = hidden_size, input_size, output_size
    k = 1.0 / jnp.sqrt(jnp.float32(H))
    keys = jax.random.split(key, 16)
    u = lambda kk, shape: jax.random.uniform(kk, shape, jnp.float32, -k, k)
    params = {
        # GRU input weights, stored transposed: (I, H) so kernel does x @ W.
        "w_ir": u(keys[0], (I, H)), "w_iz": u(keys[1], (I, H)), "w_in": u(keys[2], (I, H)),
        # GRU hidden weights, (H, H).
        "w_hr": u(keys[3], (H, H)), "w_hz": u(keys[4], (H, H)), "w_hn": u(keys[5], (H, H)),
        # Biases, kept 2D (1, H).
        "b_ir": u(keys[6], (1, H)), "b_iz": u(keys[7], (1, H)), "b_in": u(keys[8], (1, H)),
        "b_hr": u(keys[9], (1, H)), "b_hz": u(keys[10], (1, H)), "b_hn": u(keys[11], (1, H)),
        # FC head, (H, O) and (1, O).
        "w_fc": u(keys[12], (H, O)), "b_fc": u(keys[13], (1, O)),
        # h0 parameter: zeros, shape (num_layers, H), same as the PyTorch module.
        "h0": jnp.zeros((num_layers, H), jnp.float32),
    }
    return params


if __name__ == "__main__":
    # Small shapes consistent with the module's forward:
    # sequence_length=8, batch=2, input_size=16, hidden_size=32, output_size=5.
    S, B, I, H, O = 8, 2, 16, 32, 5

    key = jax.random.PRNGKey(0)
    kx, kp = jax.random.split(key)
    x = jax.random.normal(kx, (S, B, I), jnp.float32)
    params = init_params(kp, I, H, O)

    out, hidden_states = rnn_forward(x, params)
    out = jax.block_until_ready(out)
    hidden_states = jax.block_until_ready(hidden_states)

    # Validate against pure-JAX f32 reference. Tolerance is loosened vs the
    # previous all-f32 kernel because the MXU operands are now bf16
    # (accumulation stays f32); observed error is ~1e-2-scale over 8 steps.
    out_ref, hs_ref = rnn_reference(x, params)
    assert out.shape == (S, B, O) and hidden_states.shape == (S, B, H)
    assert jnp.allclose(out, out_ref, atol=5e-2, rtol=5e-2)
    assert jnp.allclose(hidden_states, hs_ref, atol=5e-2, rtol=5e-2)

    print("KERNEL_OK")
</pallas_src>

<mosaic_0001>
module attributes {stable_mosaic.version = 11 : i64} {
  func.func @gru_fc_kernel(%arg0: memref<64x16xbf16, #tpu.memory_space<vmem>>, %arg1: memref<8x128xf32, #tpu.memory_space<vmem>>, %arg2: memref<16x384xbf16, #tpu.memory_space<vmem>>, %arg3: memref<128x384xbf16, #tpu.memory_space<vmem>>, %arg4: memref<1x384xf32, #tpu.memory_space<vmem>>, %arg5: memref<1x384xf32, #tpu.memory_space<vmem>>, %arg6: memref<128x5xbf16, #tpu.memory_space<vmem>>, %arg7: memref<1x5xf32, #tpu.memory_space<vmem>>, %arg8: memref<64x5xf32, #tpu.memory_space<vmem>>, %arg9: memref<64x128xf32, #tpu.memory_space<vmem>>, %arg10: memref<64x384xf32, #tpu.memory_space<vmem>>) attributes {dimension_semantics = [], scalar_prefetch = 0 : i64, scratch_operands = 1 : i64, tpu.core_type = #tpu.core_type<tc>} {
    %c0 = arith.constant 0 : index
    %c0_0 = arith.constant 0 : index
    %0 = vector.load %arg0[%c0, %c0_0] : memref<64x16xbf16, #tpu.memory_space<vmem>>, vector<64x16xbf16>
    %c0_1 = arith.constant 0 : index
    %c0_2 = arith.constant 0 : index
    %1 = vector.load %arg2[%c0_1, %c0_2] : memref<16x384xbf16, #tpu.memory_space<vmem>>, vector<16x384xbf16>
    %cst = arith.constant dense<0.000000e+00> : vector<64x384xf32>
    %2 = tpu.matmul %0, %1, %cst {dimension_numbers = #tpu.dot_dimension_numbers<[1], [0], [0], [1], [0, 0, 1, 1], [], []>} : vector<64x16xbf16>, vector<16x384xbf16>, vector<64x384xf32> -> vector<64x384xf32>
    %c0_3 = arith.constant 0 : index
    %c0_4 = arith.constant 0 : index
    %3 = vector.load %arg4[%c0_3, %c0_4] : memref<1x384xf32, #tpu.memory_space<vmem>>, vector<1x384xf32>
    %4 = vector.broadcast %3 : vector<1x384xf32> to vector<64x384xf32>
    %5 = arith.addf %2, %4 : vector<64x384xf32>
    %c0_5 = arith.constant 0 : index
    %c0_6 = arith.constant 0 : index
    %6 = vector.load %arg10[%c0_5, %c0_6] : memref<64x384xf32, #tpu.memory_space<vmem>>, vector<64x384xf32>
    tpu.vector_store %arg10[%c0_5, %c0_6], %5 {strides = array<i32>} : memref<64x384xf32, #tpu.memory_space<vmem>>, vector<64x384xf32>,
    %c0_7 = arith.constant 0 : index
    %c0_8 = arith.constant 0 : index
    %7 = vector.load %arg3[%c0_7, %c0_8] : memref<128x384xbf16, #tpu.memory_space<vmem>>, vector<128x384xbf16>
    %c0_9 = arith.constant 0 : index
    %c0_10 = arith.constant 0 : index
    %8 = vector.load %arg5[%c0_9, %c0_10] : memref<1x384xf32, #tpu.memory_space<vmem>>, vector<1x384xf32>
    %9 = vector.shape_cast %8 : vector<1x384xf32> to vector<1x384xf32>
    %10 = vector.broadcast %9 : vector<1x384xf32> to vector<8x384xf32>
    %c0_11 = arith.constant 0 : index
    %c0_12 = arith.constant 0 : index
    %11 = vector.load %arg1[%c0_11, %c0_12] : memref<8x128xf32, #tpu.memory_space<vmem>>, vector<8x128xf32>
    %c0_13 = arith.constant 0 : index
    %c0_14 = arith.constant 0 : index
    %12 = vector.load %arg10[%c0_13, %c0_14] : memref<64x384xf32, #tpu.memory_space<vmem>>, vector<8x384xf32>
    %13 = arith.truncf %11 : vector<8x128xf32> to vector<8x128xbf16>
    %cst_15 = arith.constant dense<0.000000e+00> : vector<8x384xf32>
    %14 = tpu.matmul %13, %7, %cst_15 {dimension_numbers = #tpu.dot_dimension_numbers<[1], [0], [0], [1], [0, 0, 1, 1], [], []>} : vector<8x128xbf16>, vector<128x384xbf16>, vector<8x384xf32> -> vector<8x384xf32>
    %15 = arith.addf %14, %10 : vector<8x384xf32>
    %16 = vector.extract_strided_slice %12 {offsets = [0, 0], sizes = [8, 256], strides = [1, 1]} : vector<8x384xf32> to vector<8x256xf32>
    %17 = vector.extract_strided_slice %15 {offsets = [0, 0], sizes = [8, 256], strides = [1, 1]} : vector<8x384xf32> to vector<8x256xf32>
    %18 = arith.addf %16, %17 : vector<8x256xf32>
    %19 = arith.negf %18 : vector<8x256xf32>
    %20 = math.exp %19 : vector<8x256xf32>
    %cst_16 = arith.constant 1.000000e+00 : f32
    %21 = vector.broadcast %cst_16 : f32 to vector<8x256xf32>
    %22 = arith.addf %21, %20 : vector<8x256xf32>
    %23 = arith.divf %21, %22 : vector<8x256xf32>
    %24 = vector.extract_strided_slice %23 {offsets = [0, 0], sizes = [8, 128], strides = [1, 1]} : vector<8x256xf32> to vector<8x128xf32>
    %25 = vector.extract_strided_slice %23 {offsets = [0, 128], sizes = [8, 128], strides = [1, 1]} : vector<8x256xf32> to vector<8x128xf32>
    %26 = vector.extract_strided_slice %12 {offsets = [0, 256], sizes = [8, 128], strides = [1, 1]} : vector<8x384xf32> to vector<8x128xf32>
    %27 = vector.extract_strided_slice %15 {offsets = [0, 256], sizes = [8, 128], strides = [1, 1]} : vector<8x384xf32> to vector<8x128xf32>
    %28 = arith.mulf %24, %27 : vector<8x128xf32>
    %29 = arith.addf %26, %28 : vector<8x128xf32>
    %30 = math.tanh %29 : vector<8x128xf32>
    %cst_17 = arith.constant 1.000000e+00 : f32
    %31 = vector.broadcast %cst_17 : f32 to vector<8x128xf32>
    %32 = arith.subf %31, %25 : vector<8x128xf32>
    %33 = arith.mulf %32, %30 : vector<8x128xf32>
    %34 = arith.mulf %25, %11 : vector<8x128xf32>
    %35 = arith.addf %33, %34 : vector<8x128xf32>
    %c0_18 = arith.constant 0 : index
    %c0_19 = arith.constant 0 : index
    %36 = vector.load %arg9[%c0_18, %c0_19] : memref<64x128xf32, #tpu.memory_space<vmem>>, vector<8x128xf32>
    tpu.vector_store %arg9[%c0_18, %c0_19], %35 {strides = array<i32>} : memref<64x128xf32, #tpu.memory_space<vmem>>, vector<8x128xf32>,
    %c8 = arith.constant 8 : index
    %c0_20 = arith.constant 0 : index
    %37 = vector.load %arg10[%c8, %c0_20] : memref<64x384xf32, #tpu.memory_space<vmem>>, vector<8x384xf32>
    %38 = arith.truncf %35 : vector<8x128xf32> to vector<8x128xbf16>
    %cst_21 = arith.constant dense<0.000000e+00> : vector<8x384xf32>
    %39 = tpu.matmul %38, %7, %cst_21 {dimension_numbers = #tpu.dot_dimension_numbers<[1], [0], [0], [1], [0, 0, 1, 1], [], []>} : vector<8x128xbf16>, vector<128x384xbf16>, vector<8x384xf32> -> vector<8x384xf32>
    %40 = arith.addf %39, %10 : vector<8x384xf32>
    %41 = vector.extract_strided_slice %37 {offsets = [0, 0], sizes = [8, 256], strides = [1, 1]} : vector<8x384xf32> to vector<8x256xf32>
    %42 = vector.extract_strided_slice %40 {offsets = [0, 0], sizes = [8, 256], strides = [1, 1]} : vector<8x384xf32> to vector<8x256xf32>
    %43 = arith.addf %41, %42 : vector<8x256xf32>
    %44 = arith.negf %43 : vector<8x256xf32>
    %45 = math.exp %44 : vector<8x256xf32>
    %cst_22 = arith.constant 1.000000e+00 : f32
    %46 = vector.broadcast %cst_22 : f32 to vector<8x256xf32>
    %47 = arith.addf %46, %45 : vector<8x256xf32>
    %48 = arith.divf %46, %47 : vector<8x256xf32>
    %49 = vector.extract_strided_slice %48 {offsets = [0, 0], sizes = [8, 128], strides = [1, 1]} : vector<8x256xf32> to vector<8x128xf32>
    %50 = vector.extract_strided_slice %48 {offsets = [0, 128], sizes = [8, 128], strides = [1, 1]} : vector<8x256xf32> to vector<8x128xf32>
    %51 = vector.extract_strided_slice %37 {offsets = [0, 256], sizes = [8, 128], strides = [1, 1]} : vector<8x384xf32> to vector<8x128xf32>
    %52 = vector.extract_strided_slice %40 {offsets = [0, 256], sizes = [8, 128], strides = [1, 1]} : vector<8x384xf32> to vector<8x128xf32>
    %53 = arith.mulf %49, %52 : vector<8x128xf32>
    %54 = arith.addf %51, %53 : vector<8x128xf32>
    %55 = math.tanh %54 : vector<8x128xf32>
    %cst_23 = arith.constant 1.000000e+00 : f32
    %56 = vector.broadcast %cst_23 : f32 to vector<8x128xf32>
    %57 = arith.subf %56, %50 : vector<8x128xf32>
    %58 = arith.mulf %57, %55 : vector<8x128xf32>
    %59 = arith.mulf %50, %35 : vector<8x128xf32>
    %60 = arith.addf %58, %59 : vector<8x128xf32>
    %c8_24 = arith.constant 8 : index
    %c0_25 = arith.constant 0 : index
    %61 = vector.load %arg9[%c8_24, %c0_25] : memref<64x128xf32, #tpu.memory_space<vmem>>, vector<8x128xf32>
    tpu.vector_store %arg9[%c8_24, %c0_25], %60 {strides = array<i32>} : memref<64x128xf32, #tpu.memory_space<vmem>>, vector<8x128xf32>,
    %c16 = arith.constant 16 : index
    %c0_26 = arith.constant 0 : index
    %62 = vector.load %arg10[%c16, %c0_26] : memref<64x384xf32, #tpu.memory_space<vmem>>, vector<8x384xf32>
    %63 = arith.truncf %60 : vector<8x128xf32> to vector<8x128xbf16>
    %cst_27 = arith.constant dense<0.000000e+00> : vector<8x384xf32>
    %64 = tpu.matmul %63, %7, %cst_27 {dimension_numbers = #tpu.dot_dimension_numbers<[1], [0], [0], [1], [0, 0, 1, 1], [], []>} : vector<8x128xbf16>, vector<128x384xbf16>, vector<8x384xf32> -> vector<8x384xf32>
    %65 = arith.addf %64, %10 : vector<8x384xf32>
    %66 = vector.extract_strided_slice %62 {offsets = [0, 0], sizes = [8, 256], strides = [1, 1]} : vector<8x384xf32> to vector<8x256xf32>
    %67 = vector.extract_strided_slice %65 {offsets = [0, 0], sizes = [8, 256], strides = [1, 1]} : vector<8x384xf32> to vector<8x256xf32>
    %68 = arith.addf %66, %67 : vector<8x256xf32>
    %69 = arith.negf %68 : vector<8x256xf32>
    %70 = math.exp %69 : vector<8x256xf32>
    %cst_28 = arith.constant 1.000000e+00 : f32
    %71 = vector.broadcast %cst_28 : f32 to vector<8x256xf32>
    %72 = arith.addf %71, %70 : vector<8x256xf32>
    %73 = arith.divf %71, %72 : vector<8x256xf32>
    %74 = vector.extract_strided_slice %73 {offsets = [0, 0], sizes = [8, 128], strides = [1, 1]} : vector<8x256xf32> to vector<8x128xf32>
    %75 = vector.extract_strided_slice %73 {offsets = [0, 128], sizes = [8, 128], strides = [1, 1]} : vector<8x256xf32> to vector<8x128xf32>
    %76 = vector.extract_strided_slice %62 {offsets = [0, 256], sizes = [8, 128], strides = [1, 1]} : vector<8x384xf32> to vector<8x128xf32>
    %77 = vector.extract_strided_slice %65 {offsets = [0, 256], sizes = [8, 128], strides = [1, 1]} : vector<8x384xf32> to vector<8x128xf32>
    %78 = arith.mulf %74, %77 : vector<8x128xf32>
    %79 = arith.addf %76, %78 : vector<8x128xf32>
    %80 = math.tanh %79 : vector<8x128xf32>
    %cst_29 = arith.constant 1.000000e+00 : f32
    %81 = vector.broadcast %cst_29 : f32 to vector<8x128xf32>
    %82 = arith.subf %81, %75 : vector<8x128xf32>
    %83 = arith.mulf %82, %80 : vector<8x128xf32>
    %84 = arith.mulf %75, %60 : vector<8x128xf32>
    %85 = arith.addf %83, %84 : vector<8x128xf32>
    %c16_30 = arith.constant 16 : index
    %c0_31 = arith.constant 0 : index
    %86 = vector.load %arg9[%c16_30, %c0_31] : memref<64x128xf32, #tpu.memory_space<vmem>>, vector<8x128xf32>
    tpu.vector_store %arg9[%c16_30, %c0_31], %85 {strides = array<i32>} : memref<64x128xf32, #tpu.memory_space<vmem>>, vector<8x128xf32>,
    %c24 = arith.constant 24 : index
    %c0_32 = arith.constant 0 : index
    %87 = vector.load %arg10[%c24, %c0_32] : memref<64x384xf32, #tpu.memory_space<vmem>>, vector<8x384xf32>
    %88 = arith.truncf %85 : vector<8x128xf32> to vector<8x128xbf16>
    %cst_33 = arith.constant dense<0.000000e+00> : vector<8x384xf32>
    %89 = tpu.matmul %88, %7, %cst_33 {dimension_numbers = #tpu.dot_dimension_numbers<[1], [0], [0], [1], [0, 0, 1, 1], [], []>} : vector<8x128xbf16>, vector<128x384xbf16>, vector<8x384xf32> -> vector<8x384xf32>
    %90 = arith.addf %89, %10 : vector<8x384xf32>
    %91 = vector.extract_strided_slice %87 {offsets = [0, 0], sizes = [8, 256], strides = [1, 1]} : vector<8x384xf32> to vector<8x256xf32>
    %92 = vector.extract_strided_slice %90 {offsets = [0, 0], sizes = [8, 256], strides = [1, 1]} : vector<8x384xf32> to vector<8x256xf32>
    %93 = arith.addf %91, %92 : vector<8x256xf32>
    %94 = arith.negf %93 : vector<8x256xf32>
    %95 = math.exp %94 : vector<8x256xf32>
    %cst_34 = arith.constant 1.000000e+00 : f32
    %96 = vector.broadcast %cst_34 : f32 to vector<8x256xf32>
    %97 = arith.addf %96, %95 : vector<8x256xf32>
    %98 = arith.divf %96, %97 : vector<8x256xf32>
    %99 = vector.extract_strided_slice %98 {offsets = [0, 0], sizes = [8, 128], strides = [1, 1]} : vector<8x256xf32> to vector<8x128xf32>
    %100 = vector.extract_strided_slice %98 {offsets = [0, 128], sizes = [8, 128], strides = [1, 1]} : vector<8x256xf32> to vector<8x128xf32>
    %101 = vector.extract_strided_slice %87 {offsets = [0, 256], sizes = [8, 128], strides = [1, 1]} : vector<8x384xf32> to vector<8x128xf32>
    %102 = vector.extract_strided_slice %90 {offsets = [0, 256], sizes = [8, 128], strides = [1, 1]} : vector<8x384xf32> to vector<8x128xf32>
    %103 = arith.mulf %99, %102 : vector<8x128xf32>
    %104 = arith.addf %101, %103 : vector<8x128xf32>
    %105 = math.tanh %104 : vector<8x128xf32>
    %cst_35 = arith.constant 1.000000e+00 : f32
    %106 = vector.broadcast %cst_35 : f32 to vector<8x128xf32>
    %107 = arith.subf %106, %100 : vector<8x128xf32>
    %108 = arith.mulf %107, %105 : vector<8x128xf32>
    %109 = arith.mulf %100, %85 : vector<8x128xf32>
    %110 = arith.addf %108, %109 : vector<8x128xf32>
    %c24_36 = arith.constant 24 : index
    %c0_37 = arith.constant 0 : index
    %111 = vector.load %arg9[%c24_36, %c0_37] : memref<64x128xf32, #tpu.memory_space<vmem>>, vector<8x128xf32>
    tpu.vector_store %arg9[%c24_36, %c0_37], %110 {strides = array<i32>} : memref<64x128xf32, #tpu.memory_space<vmem>>, vector<8x128xf32>,
    %c32 = arith.constant 32 : index
    %c0_38 = arith.constant 0 : index
    %112 = vector.load %arg10[%c32, %c0_38] : memref<64x384xf32, #tpu.memory_space<vmem>>, vector<8x384xf32>
    %113 = arith.truncf %110 : vector<8x128xf32> to vector<8x128xbf16>
    %cst_39 = arith.constant dense<0.000000e+00> : vector<8x384xf32>
    %114 = tpu.matmul %113, %7, %cst_39 {dimension_numbers = #tpu.dot_dimension_numbers<[1], [0], [0], [1], [0, 0, 1, 1], [], []>} : vector<8x128xbf16>, vector<128x384xbf16>, vector<8x384xf32> -> vector<8x384xf32>
    %115 = arith.addf %114, %10 : vector<8x384xf32>
    %116 = vector.extract_strided_slice %112 {offsets = [0, 0], sizes = [8, 256], strides = [1, 1]} : vector<8x384xf32> to vector<8x256xf32>
    %117 = vector.extract_strided_slice %115 {offsets = [0, 0], sizes = [8, 256], strides = [1, 1]} : vector<8x384xf32> to vector<8x256xf32>
    %118 = arith.addf %116, %117 : vector<8x256xf32>
    %119 = arith.negf %118 : vector<8x256xf32>
    %120 = math.exp %119 : vector<8x256xf32>
    %cst_40 = arith.constant 1.000000e+00 : f32
    %121 = vector.broadcast %cst_40 : f32 to vector<8x256xf32>
    %122 = arith.addf %121, %120 : vector<8x256xf32>
    %123 = arith.divf %121, %122 : vector<8x256xf32>
    %124 = vector.extract_strided_slice %123 {offsets = [0, 0], sizes = [8, 128], strides = [1, 1]} : vector<8x256xf32> to vector<8x128xf32>
    %125 = vector.extract_strided_slice %123 {offsets = [0, 128], sizes = [8, 128], strides = [1, 1]} : vector<8x256xf32> to vector<8x128xf32>
    %126 = vector.extract_strided_slice %112 {offsets = [0, 256], sizes = [8, 128], strides = [1, 1]} : vector<8x384xf32> to vector<8x128xf32>
    %127 = vector.extract_strided_slice %115 {offsets = [0, 256], sizes = [8, 128], strides = [1, 1]} : vector<8x384xf32> to vector<8x128xf32>
    %128 = arith.mulf %124, %127 : vector<8x128xf32>
    %129 = arith.addf %126, %128 : vector<8x128xf32>
    %130 = math.tanh %129 : vector<8x128xf32>
    %cst_41 = arith.constant 1.000000e+00 : f32
    %131 = vector.broadcast %cst_41 : f32 to vector<8x128xf32>
    %132 = arith.subf %131, %125 : vector<8x128xf32>
    %133 = arith.mulf %132, %130 : vector<8x128xf32>
    %134 = arith.mulf %125, %110 : vector<8x128xf32>
    %135 = arith.addf %133, %134 : vector<8x128xf32>
    %c32_42 = arith.constant 32 : index
    %c0_43 = arith.constant 0 : index
    %136 = vector.load %arg9[%c32_42, %c0_43] : memref<64x128xf32, #tpu.memory_space<vmem>>, vector<8x128xf32>
    tpu.vector_store %arg9[%c32_42, %c0_43], %135 {strides = array<i32>} : memref<64x128xf32, #tpu.memory_space<vmem>>, vector<8x128xf32>,
    %c40 = arith.constant 40 : index
    %c0_44 = arith.constant 0 : index
    %137 = vector.load %arg10[%c40, %c0_44] : memref<64x384xf32, #tpu.memory_space<vmem>>, vector<8x384xf32>
    %138 = arith.truncf %135 : vector<8x128xf32> to vector<8x128xbf16>
    %cst_45 = arith.constant dense<0.000000e+00> : vector<8x384xf32>
    %139 = tpu.matmul %138, %7, %cst_45 {dimension_numbers = #tpu.dot_dimension_numbers<[1], [0], [0], [1], [0, 0, 1, 1], [], []>} : vector<8x128xbf16>, vector<128x384xbf16>, vector<8x384xf32> -> vector<8x384xf32>
    %140 = arith.addf %139, %10 : vector<8x384xf32>
    %141 = vector.extract_strided_slice %137 {offsets = [0, 0], sizes = [8, 256], strides = [1, 1]} : vector<8x384xf32> to vector<8x256xf32>
    %142 = vector.extract_strided_slice %140 {offsets = [0, 0], sizes = [8, 256], strides = [1, 1]} : vector<8x384xf32> to vector<8x256xf32>
    %143 = arith.addf %141, %142 : vector<8x256xf32>
    %144 = arith.negf %143 : vector<8x256xf32>
    %145 = math.exp %144 : vector<8x256xf32>
    %cst_46 = arith.constant 1.000000e+00 : f32
    %146 = vector.broadcast %cst_46 : f32 to vector<8x256xf32>
    %147 = arith.addf %146, %145 : vector<8x256xf32>
    %148 = arith.divf %146, %147 : vector<8x256xf32>
    %149 = vector.extract_strided_slice %148 {offsets = [0, 0], sizes = [8, 128], strides = [1, 1]} : vector<8x256xf32> to vector<8x128xf32>
    %150 = vector.extract_strided_slice %148 {offsets = [0, 128], sizes = [8, 128], strides = [1, 1]} : vector<8x256xf32> to vector<8x128xf32>
    %151 = vector.extract_strided_slice %137 {offsets = [0, 256], sizes = [8, 128], strides = [1, 1]} : vector<8x384xf32> to vector<8x128xf32>
    %152 = vector.extract_strided_slice %140 {offsets = [0, 256], sizes = [8, 128], strides = [1, 1]} : vector<8x384xf32> to vector<8x128xf32>
    %153 = arith.mulf %149, %152 : vector<8x128xf32>
    %154 = arith.addf %151, %153 : vector<8x128xf32>
    %155 = math.tanh %154 : vector<8x128xf32>
    %cst_47 = arith.constant 1.000000e+00 : f32
    %156 = vector.broadcast %cst_47 : f32 to vector<8x128xf32>
    %157 = arith.subf %156, %150 : vector<8x128xf32>
    %158 = arith.mulf %157, %155 : vector<8x128xf32>
    %159 = arith.mulf %150, %135 : vector<8x128xf32>
    %160 = arith.addf %158, %159 : vector<8x128xf32>
    %c40_48 = arith.constant 40 : index
    %c0_49 = arith.constant 0 : index
    %161 = vector.load %arg9[%c40_48, %c0_49] : memref<64x128xf32, #tpu.memory_space<vmem>>, vector<8x128xf32>
    tpu.vector_store %arg9[%c40_48, %c0_49], %160 {strides = array<i32>} : memref<64x128xf32, #tpu.memory_space<vmem>>, vector<8x128xf32>,
    %c48 = arith.constant 48 : index
    %c0_50 = arith.constant 0 : index
    %162 = vector.load %arg10[%c48, %c0_50] : memref<64x384xf32, #tpu.memory_space<vmem>>, vector<8x384xf32>
    %163 = arith.truncf %160 : vector<8x128xf32> to vector<8x128xbf16>
    %cst_51 = arith.constant dense<0.000000e+00> : vector<8x384xf32>
    %164 = tpu.matmul %163, %7, %cst_51 {dimension_numbers = #tpu.dot_dimension_numbers<[1], [0], [0], [1], [0, 0, 1, 1], [], []>} : vector<8x128xbf16>, vector<128x384xbf16>, vector<8x384xf32> -> vector<8x384xf32>
    %165 = arith.addf %164, %10 : vector<8x384xf32>
    %166 = vector.extract_strided_slice %162 {offsets = [0, 0], sizes = [8, 256], strides = [1, 1]} : vector<8x384xf32> to vector<8x256xf32>
    %167 = vector.extract_strided_slice %165 {offsets = [0, 0], sizes = [8, 256], strides = [1, 1]} : vector<8x384xf32> to vector<8x256xf32>
    %168 = arith.addf %166, %167 : vector<8x256xf32>
    %169 = arith.negf %168 : vector<8x256xf32>
    %170 = math.exp %169 : vector<8x256xf32>
    %cst_52 = arith.constant 1.000000e+00 : f32
    %171 = vector.broadcast %cst_52 : f32 to vector<8x256xf32>
    %172 = arith.addf %171, %170 : vector<8x256xf32>
    %173 = arith.divf %171, %172 : vector<8x256xf32>
    %174 = vector.extract_strided_slice %173 {offsets = [0, 0], sizes = [8, 128], strides = [1, 1]} : vector<8x256xf32> to vector<8x128xf32>
    %175 = vector.extract_strided_slice %173 {offsets = [0, 128], sizes = [8, 128], strides = [1, 1]} : vector<8x256xf32> to vector<8x128xf32>
    %176 = vector.extract_strided_slice %162 {offsets = [0, 256], sizes = [8, 128], strides = [1, 1]} : vector<8x384xf32> to vector<8x128xf32>
    %177 = vector.extract_strided_slice %165 {offsets = [0, 256], sizes = [8, 128], strides = [1, 1]} : vector<8x384xf32> to vector<8x128xf32>
    %178 = arith.mulf %174, %177 : vector<8x128xf32>
    %179 = arith.addf %176, %178 : vector<8x128xf32>
    %180 = math.tanh %179 : vector<8x128xf32>
    %cst_53 = arith.constant 1.000000e+00 : f32
    %181 = vector.broadcast %cst_53 : f32 to vector<8x128xf32>
    %182 = arith.subf %181, %175 : vector<8x128xf32>
    %183 = arith.mulf %182, %180 : vector<8x128xf32>
    %184 = arith.mulf %175, %160 : vector<8x128xf32>
    %185 = arith.addf %183, %184 : vector<8x128xf32>
    %c48_54 = arith.constant 48 : index
    %c0_55 = arith.constant 0 : index
    %186 = vector.load %arg9[%c48_54, %c0_55] : memref<64x128xf32, #tpu.memory_space<vmem>>, vector<8x128xf32>
    tpu.vector_store %arg9[%c48_54, %c0_55], %185 {strides = array<i32>} : memref<64x128xf32, #tpu.memory_space<vmem>>, vector<8x128xf32>,
    %c56 = arith.constant 56 : index
    %c0_56 = arith.constant 0 : index
    %187 = vector.load %arg10[%c56, %c0_56] : memref<64x384xf32, #tpu.memory_space<vmem>>, vector<8x384xf32>
    %188 = arith.truncf %185 : vector<8x128xf32> to vector<8x128xbf16>
    %cst_57 = arith.constant dense<0.000000e+00> : vector<8x384xf32>
    %189 = tpu.matmul %188, %7, %cst_57 {dimension_numbers = #tpu.dot_dimension_numbers<[1], [0], [0], [1], [0, 0, 1, 1], [], []>} : vector<8x128xbf16>, vector<128x384xbf16>, vector<8x384xf32> -> vector<8x384xf32>
    %190 = arith.addf %189, %10 : vector<8x384xf32>
    %191 = vector.extract_strided_slice %187 {offsets = [0, 0], sizes = [8, 256], strides = [1, 1]} : vector<8x384xf32> to vector<8x256xf32>
    %192 = vector.extract_strided_slice %190 {offsets = [0, 0], sizes = [8, 256], strides = [1, 1]} : vector<8x384xf32> to vector<8x256xf32>
    %193 = arith.addf %191, %192 : vector<8x256xf32>
    %194 = arith.negf %193 : vector<8x256xf32>
    %195 = math.exp %194 : vector<8x256xf32>
    %cst_58 = arith.constant 1.000000e+00 : f32
    %196 = vector.broadcast %cst_58 : f32 to vector<8x256xf32>
    %197 = arith.addf %196, %195 : vector<8x256xf32>
    %198 = arith.divf %196, %197 : vector<8x256xf32>
    %199 = vector.extract_strided_slice %198 {offsets = [0, 0], sizes = [8, 128], strides = [1, 1]} : vector<8x256xf32> to vector<8x128xf32>
    %200 = vector.extract_strided_slice %198 {offsets = [0, 128], sizes = [8, 128], strides = [1, 1]} : vector<8x256xf32> to vector<8x128xf32>
    %201 = vector.extract_strided_slice %187 {offsets = [0, 256], sizes = [8, 128], strides = [1, 1]} : vector<8x384xf32> to vector<8x128xf32>
    %202 = vector.extract_strided_slice %190 {offsets = [0, 256], sizes = [8, 128], strides = [1, 1]} : vector<8x384xf32> to vector<8x128xf32>
    %203 = arith.mulf %199, %202 : vector<8x128xf32>
    %204 = arith.addf %201, %203 : vector<8x128xf32>
    %205 = math.tanh %204 : vector<8x128xf32>
    %cst_59 = arith.constant 1.000000e+00 : f32
    %206 = vector.broadcast %cst_59 : f32 to vector<8x128xf32>
    %207 = arith.subf %206, %200 : vector<8x128xf32>
    %208 = arith.mulf %207, %205 : vector<8x128xf32>
    %209 = arith.mulf %200, %185 : vector<8x128xf32>
    %210 = arith.addf %208, %209 : vector<8x128xf32>
    %c56_60 = arith.constant 56 : index
    %c0_61 = arith.constant 0 : index
    %211 = vector.load %arg9[%c56_60, %c0_61] : memref<64x128xf32, #tpu.memory_space<vmem>>, vector<8x128xf32>
    tpu.vector_store %arg9[%c56_60, %c0_61], %210 {strides = array<i32>} : memref<64x128xf32, #tpu.memory_space<vmem>>, vector<8x128xf32>,
    %c0_62 = arith.constant 0 : index
    %c0_63 = arith.constant 0 : index
    %212 = vector.load %arg9[%c0_62, %c0_63] : memref<64x128xf32, #tpu.memory_space<vmem>>, vector<64x128xf32>
    %213 = arith.truncf %212 : vector<64x128xf32> to vector<64x128xbf16>
    %c0_64 = arith.constant 0 : index
    %c0_65 = arith.constant 0 : index
    %214 = vector.load %arg6[%c0_64, %c0_65] : memref<128x5xbf16, #tpu.memory_space<vmem>>, vector<128x5xbf16>
    %cst_66 = arith.constant dense<0.000000e+00> : vector<64x5xf32>
    %215 = tpu.matmul %213, %214, %cst_66 {dimension_numbers = #tpu.dot_dimension_numbers<[1], [0], [0], [1], [0, 0, 1, 1], [], []>} : vector<64x128xbf16>, vector<128x5xbf16>, vector<64x5xf32> -> vector<64x5xf32>
    %c0_67 = arith.constant 0 : index
    %c0_68 = arith.constant 0 : index
    %216 = vector.load %arg7[%c0_67, %c0_68] : memref<1x5xf32, #tpu.memory_space<vmem>>, vector<1x5xf32>
    %217 = vector.broadcast %216 : vector<1x5xf32> to vector<64x5xf32>
    %218 = arith.addf %215, %217 : vector<64x5xf32>
    %c0_69 = arith.constant 0 : index
    %c0_70 = arith.constant 0 : index
    %219 = vector.load %arg8[%c0_69, %c0_70] : memref<64x5xf32, #tpu.memory_space<vmem>>, vector<64x5xf32>
    tpu.vector_store %arg8[%c0_69, %c0_70], %218 {strides = array<i32>} : memref<64x5xf32, #tpu.memory_space<vmem>>, vector<64x5xf32>,
    return
  }
}

</mosaic_0001>

<llo_original>
// kernel: tpu_custom_call.1
$region0: #{tpu_custom_call.1}
  #allocation0 [shape = 'u32[]', space=smem, size = 0x4, offset = 0x4, fixed_abs, tag = 'smem constant byte address 0x4 - core index']
  #allocation1 [shape = 'u32[144,128]{1,0:T(1,128)}', space=vmem, size = 0x12000, scoped, tag = 'internal scratch']
  #allocation2 [shape = 'f32[64,384]{1,0:T(8,128)}', space=vmem, size = 0x18000, scoped, tag = 'scratch operand']
  %s0 = inlined_call_operand.vmem [shape: bf16[64,16], index: 0, kind: input, shape index: {}]
  %s1 = inlined_call_operand.vmem [shape: f32[8,128], index: 1, kind: input, shape index: {}]
  %s2 = inlined_call_operand.vmem [shape: bf16[16,384], index: 2, kind: input, shape index: {}]
  %s3 = inlined_call_operand.hbm [shape: bf16[128,384], index: 3, kind: input, shape index: {}]
  %s4 = inlined_call_operand.vmem [shape: f32[1,384], index: 4, kind: input, shape index: {}]
  %s5 = inlined_call_operand.vmem [shape: f32[1,384], index: 5, kind: input, shape index: {}]
  %s6 = inlined_call_operand.vmem [shape: bf16[128,5], index: 6, kind: input, shape index: {}]
  %s7 = inlined_call_operand.vmem [shape: f32[1,5], index: 7, kind: input, shape index: {}]
  %s8 = inlined_call_operand.vmem [shape: f32[64,5], index: 8, kind: output, shape index: {0}]
  %s9 = inlined_call_operand.hbm [shape: f32[64,128], index: 9, kind: output, shape index: {1}]
  %10 = xla_tuple %s8, %s9
  %s11 = sld [smem:[#allocation0]]
  $region54: #{tpu_custom_call.1} parent=0
    _
  %s13 = ssub.s32 1, %s11
  %s14 = scalar_select 0, %s13, %s11
  $region1: #{tpu_custom_call.1} parent=0
    #allocation3 [shape = 'u8[98304]{0}', space=vmem, size = 0x18000, scoped, tag = 'input window, operand 3, single buffered']
    #allocation4 [shape = 's32[1]{0}', space=sflag, size = 0x4, scoped, tag = 'scoped memory for tpu_custom_call.1']
    #allocation5 [shape = 's32[1]{0}', space=sflag, size = 0x4, scoped, tag = 'scoped memory for tpu_custom_call.1']
    #allocation6 [shape = 'u8[32768]{0}', space=vmem, size = 0x8000, scoped, tag = 'output window, operand 1, single buffered']
    %15 = vsyncpa [#allocation4], 0
    %16 = vsyncpa [#allocation5], 0
    // Predicated region
    $region2: #{tpu_custom_call.1} parent=1 // pred_check
      _
    $region3: #{tpu_custom_call.1} parent=1 // pred_check_branch
      %18 = sbr.rel (0) target = $region5
    $region4: #{tpu_custom_call.1} parent=1 // pred_region
      _
    $region5: #{tpu_custom_call.1} parent=1 // pred_fallthru
      _
    // Predicated region
    $region6: #{tpu_custom_call.1} parent=1 // pred_check
      _
    $region7: #{tpu_custom_call.1} parent=1 // pred_check_branch
      %20 = sbr.rel (0) target = $region9
    $region8: #{tpu_custom_call.1} parent=1 // pred_region
      _
    $region9: #{tpu_custom_call.1} parent=1 // pred_fallthru
      _
    // Predicated region
    $region10: #{tpu_custom_call.1} parent=1 // pred_check
      _
    $region11: #{tpu_custom_call.1} parent=1 // pred_check_branch
      %22 = sbr.rel (0) target = $region13
    $region12: #{tpu_custom_call.1} parent=1 // pred_region
      _
    $region13: #{tpu_custom_call.1} parent=1 // pred_fallthru
      _
    // Predicated region
    $region14: #{tpu_custom_call.1} parent=1 // pred_check
      _
    $region15: #{tpu_custom_call.1} parent=1 // pred_check_branch
      %24 = sbr.rel (0) target = $region17
    $region16: #{tpu_custom_call.1} parent=1 // pred_region
      %s26 = ssub.s32 3072, 3072
      %27 = vsyncadd [#allocation4], %s26
      %s28 = sshll.u32 [#allocation3], 4
      %s29 = int_to_ptr.vmem [resolvable:$true] %s28
      %34 = dma.hbm_to_vmem [thread:$0]  %s3, 3072, %s29, [#allocation4], 192, 192, 12
    $region17: #{tpu_custom_call.1} parent=1 // pred_fallthru
      _
    // Predicated region
    $region18: #{tpu_custom_call.1} parent=1 // pred_check
      _
    $region19: #{tpu_custom_call.1} parent=1 // pred_check_branch
      %36 = sbr.rel (0) target = $region21
    $region20: #{tpu_custom_call.1} parent=1 // pred_region
      _
    $region21: #{tpu_custom_call.1} parent=1 // pred_fallthru
      _
    // Predicated region
    $region22: #{tpu_custom_call.1} parent=1 // pred_check
      _
    $region23: #{tpu_custom_call.1} parent=1 // pred_check_branch
      %38 = sbr.rel (0) target = $region25
    $region24: #{tpu_custom_call.1} parent=1 // pred_region
      _
    $region25: #{tpu_custom_call.1} parent=1 // pred_fallthru
      _
    // Predicated region
    $region26: #{tpu_custom_call.1} parent=1 // pred_check
      _
    $region27: #{tpu_custom_call.1} parent=1 // pred_check_branch
      %40 = sbr.rel (0) target = $region29
    $region28: #{tpu_custom_call.1} parent=1 // pred_region
      _
    $region29: #{tpu_custom_call.1} parent=1 // pred_fallthru
      _
    // Predicated region
    $region30: #{tpu_custom_call.1} parent=1 // pred_check
      _
    $region31: #{tpu_custom_call.1} parent=1 // pred_check_branch
      %42 = sbr.rel (0) target = $region33
    $region32: #{tpu_custom_call.1} parent=1 // pred_region
      _
    $region33: #{tpu_custom_call.1} parent=1 // pred_fallthru
      _
    // Predicated region
    $region34: #{tpu_custom_call.1} parent=1 // pred_check
      _
    $region35: #{tpu_custom_call.1} parent=1 // pred_check_branch
      %44 = sbr.rel (0) target = $region37
    $region36: #{tpu_custom_call.1} parent=1 // pred_region
      %45 = dma.done [#allocation4], 3072
    $region37: #{tpu_custom_call.1} parent=1 // pred_fallthru
      _
    %v47 = vld [vmem:[%s0] sm:$0xf]
    %v48 = vld [vmem:[%s0 + $0x4] sm:$0xf]
    %v49 = vld [vmem:[%s0 + $0x8] sm:$0xf]
    %v50 = vld [vmem:[%s0 + $0xc] sm:$0xf]
    %v51 = vld [vmem:[%s0 + $0x10] sm:$0xf]
    %v52 = vld [vmem:[%s0 + $0x14] sm:$0xf]
    %v53 = vld [vmem:[%s0 + $0x18] sm:$0xf]
    %v54 = vld [vmem:[%s0 + $0x1c] sm:$0xf]
    %v55 = vld [vmem:[%s2] sm:$0xff]
    %v56 = vld [vmem:[%s2 + $0x8] sm:$0xf]
    %v57 = vld [vmem:[%s2 + $0xc] sm:$0xff]
    %v58 = vld [vmem:[%s2 + $0x14] sm:$0xf]
    %v59 = vld [vmem:[%s4] sm:$0x7]
    %v61 = vlaneseq
    %v62 = vshrl.u32 %v61, 7
    %v63 = vsub.s32 0, %v62
    %v64 = vrot.slane %v59, %v63
    %v65 = vlaneseq
    %v66 = vshrl.u32 %v65, 7
    %v67 = vsub.s32 1, %v66
    %v68 = vrot.slane %v59, %v67
    %v69 = vlaneseq
    %v70 = vshrl.u32 %v69, 7
    %v71 = vsub.s32 2, %v70
    %v72 = vrot.slane %v59, %v71
    %v84 = vunpack.c.l.b16 %v47
    %v85 = vunpack.c.l.b16 %v48
    %v86 = vunpack.c.l.b16 %v49
    %v87 = vunpack.c.l.b16 %v50
    %v88 = vunpack.c.l.b16 %v51
    %v89 = vunpack.c.l.b16 %v52
    %v90 = vunpack.c.l.b16 %v53
    %v91 = vunpack.c.l.b16 %v54
    %v92 = vpack.c.b16 %v85, %v84
    %v93 = vpack.c.b16 %v87, %v86
    %v94 = vpack.c.b16 %v89, %v88
    %v95 = vpack.c.b16 %v91, %v90
    %v100 = vunpack.c.l.b16 %v55
    %v101 = vunpack.c.h.b16 %v55
    %v102 = vunpack.c.l.b16 %v56
    %v103 = vunpack.c.l.b16 %v57
    %v104 = vunpack.c.h.b16 %v57
    %v105 = vunpack.c.l.b16 %v58
    %v106 = vpack.c.b16 %v103, %v100
    %v107 = vpack.c.b16 %v104, %v101
    %v108 = vpack.c.b16 %v105, %v102
    %vm112 = vcmask 130048
    %v114 = vsel %vm112, %v92, 0
    %v117 = vsel %vm112, %v93, 0
    %v120 = vsel %vm112, %v94, 0
    %v123 = vsel %vm112, %v95, 0
    %125 = vmatprep.subr.bf16.mxu0 0
    %126 = vmatpush1.bf16.msra.mxu0 0
    %127 = vmatprep.subr.bf16.mxu0 0
    %128 = vmatpush1.bf16.msra.mxu0 0
    %129 = vmatprep.subr.bf16.mxu0 0
    %130 = vmatpush1.bf16.msra.mxu0 0
    %131 = vmatprep.subr.bf16.mxu0 0
    %132 = vmatpush1.bf16.msra.mxu0 0
    %133 = vmatprep.subr.bf16.mxu0 0
    %134 = vmatpush1.bf16.msra.mxu0 0
    %135 = vmatprep.subr.bf16.mxu0 0
    %136 = vmatpush1.bf16.msra.mxu0 0
    %137 = vmatprep.subr.bf16.mxu0 0
    %138 = vmatpush1.bf16.msra.mxu0 0
    %139 = vmatprep.subr.bf16.mxu0 %v107
    %140 = vmatpush1.bf16.msra.mxu0 %v106
    %141 = vmatprep.subr.bf16.mxu0 0
    %142 = vmatpush2.bf16.msra.mxu0 0
    %143 = vmatprep.subr.bf16.mxu0 0
    %144 = vmatpush2.bf16.msra.mxu0 0
    %145 = vmatprep.subr.bf16.mxu0 0
    %146 = vmatpush2.bf16.msra.mxu0 0
    %147 = vmatprep.subr.bf16.mxu0 0
    %148 = vmatpush2.bf16.msra.mxu0 0
    %149 = vmatprep.subr.bf16.mxu0 0
    %150 = vmatpush2.bf16.msra.mxu0 0
    %151 = vmatprep.subr.bf16.mxu0 0
    %152 = vmatpush2.bf16.msra.mxu0 0
    %153 = vmatprep.subr.bf16.mxu0 0
    %154 = vmatpush2.bf16.msra.mxu0 0
    %155 = vmatprep.subr.bf16.mxu0 0
    %156 = vmatpush2.bf16.msra.mxu0 0
    %157 = vmatprep.mubr.bf16.mxu0 0
    %158 = vmatmul.mubr.bf16.gmra.mxu0 %v114
    %v159 = vpop.f32.mrf.mxu0
    %v160 = vadd.f32 %v64, %v159
    %v161 = vpop.f32.mrf.mxu0
    %v162 = vadd.f32 %v68, %v161
    %v163 = vpop.f32.mrf.mxu0
    %v164 = vadd.f32 %v64, %v163
    %v165 = vpop.f32.mrf.mxu0
    %v166 = vadd.f32 %v68, %v165
    %167 = vmatprep.mubr.bf16.mxu0 0
    %168 = vmatmul.mubr.bf16.gmra.mxu0 %v117
    %v169 = vpop.f32.mrf.mxu0
    %v170 = vadd.f32 %v64, %v169
    %v171 = vpop.f32.mrf.mxu0
    %v172 = vadd.f32 %v68, %v171
    %v173 = vpop.f32.mrf.mxu0
    %v174 = vadd.f32 %v64, %v173
    %v175 = vpop.f32.mrf.mxu0
    %v176 = vadd.f32 %v68, %v175
    %177 = vmatprep.mubr.bf16.mxu0 0
    %178 = vmatmul.mubr.bf16.gmra.mxu0 %v120
    %v179 = vpop.f32.mrf.mxu0
    %v180 = vadd.f32 %v64, %v179
    %v181 = vpop.f32.mrf.mxu0
    %v182 = vadd.f32 %v68, %v181
    %v183 = vpop.f32.mrf.mxu0
    %v184 = vadd.f32 %v64, %v183
    %v185 = vpop.f32.mrf.mxu0
    %v186 = vadd.f32 %v68, %v185
    %187 = vmatprep.mubr.bf16.mxu0 0
    %188 = vmatmul.mubr.bf16.gmra.mxu0 %v123
    %v189 = vpop.f32.mrf.mxu0
    %v190 = vadd.f32 %v64, %v189
    %v191 = vpop.f32.mrf.mxu0
    %v192 = vadd.f32 %v68, %v191
    %v193 = vpop.f32.mrf.mxu0
    %v194 = vadd.f32 %v64, %v193
    %v195 = vpop.f32.mrf.mxu0
    %v196 = vadd.f32 %v68, %v195
    %197 = vdwg.mxu0
    %198 = vmatprep.subr.bf16.mxu0 0
    %199 = vmatpush1.bf16.msra.mxu0 0
    %200 = vmatprep.subr.bf16.mxu0 0
    %201 = vmatpush1.bf16.msra.mxu0 0
    %202 = vmatprep.subr.bf16.mxu0 0
    %203 = vmatpush1.bf16.msra.mxu0 0
    %204 = vmatprep.subr.bf16.mxu0 0
    %205 = vmatpush1.bf16.msra.mxu0 0
    %206 = vmatprep.subr.bf16.mxu0 0
    %207 = vmatpush1.bf16.msra.mxu0 0
    %208 = vmatprep.subr.bf16.mxu0 0
    %209 = vmatpush1.bf16.msra.mxu0 0
    %210 = vmatprep.subr.bf16.mxu0 0
    %211 = vmatpush1.bf16.msra.mxu0 0
    %212 = vmatprep.subr.bf16.mxu0 0
    %213 = vmatpush1.bf16.msra.mxu0 %v108
    %214 = vmatprep.subr.bf16.mxu0 0
    %215 = vmatpush2.bf16.msra.mxu0 0
    %216 = vmatprep.subr.bf16.mxu0 0
    %217 = vmatpush2.bf16.msra.mxu0 0
    %218 = vmatprep.subr.bf16.mxu0 0
    %219 = vmatpush2.bf16.msra.mxu0 0
    %220 = vmatprep.subr.bf16.mxu0 0
    %221 = vmatpush2.bf16.msra.mxu0 0
    %222 = vmatprep.subr.bf16.mxu0 0
    %223 = vmatpush2.bf16.msra.mxu0 0
    %224 = vmatprep.subr.bf16.mxu0 0
    %225 = vmatpush2.bf16.msra.mxu0 0
    %226 = vmatprep.subr.bf16.mxu0 0
    %227 = vmatpush2.bf16.msra.mxu0 0
    %228 = vmatprep.subr.bf16.mxu0 0
    %229 = vmatpush2.bf16.msra.mxu0 0
    %230 = vmatprep.mubr.bf16.mxu0 0
    %231 = vmatmul.mubr.bf16.gmra.mxu0 %v114
    %v232 = vpop.f32.mrf.mxu0
    %v233 = vadd.f32 %v72, %v232
    %v234 = vpop.f32.mrf.mxu0
    %v235 = vpop.f32.mrf.mxu0
    %v236 = vadd.f32 %v72, %v235
    %v237 = vpop.f32.mrf.mxu0
    %238 = vmatprep.mubr.bf16.mxu0 0
    %239 = vmatmul.mubr.bf16.gmra.mxu0 %v117
    %v240 = vpop.f32.mrf.mxu0
    %v241 = vadd.f32 %v72, %v240
    %v242 = vpop.f32.mrf.mxu0
    %v243 = vpop.f32.mrf.mxu0
    %v244 = vadd.f32 %v72, %v243
    %v245 = vpop.f32.mrf.mxu0
    %246 = vmatprep.mubr.bf16.mxu0 0
    %247 = vmatmul.mubr.bf16.gmra.mxu0 %v120
    %v248 = vpop.f32.mrf.mxu0
    %v249 = vadd.f32 %v72, %v248
    %v250 = vpop.f32.mrf.mxu0
    %v251 = vpop.f32.mrf.mxu0
    %v252 = vadd.f32 %v72, %v251
    %v253 = vpop.f32.mrf.mxu0
    %254 = vmatprep.mubr.bf16.mxu0 0
    %255 = vmatmul.mubr.bf16.gmra.mxu0 %v123
    %v256 = vpop.f32.mrf.mxu0
    %v257 = vadd.f32 %v72, %v256
    %v258 = vpop.f32.mrf.mxu0
    %v259 = vpop.f32.mrf.mxu0
    %v260 = vadd.f32 %v72, %v259
    %v261 = vpop.f32.mrf.mxu0
    %262 = vdwg.mxu0
    %263 = vst [vmem:[#allocation2] sm:$0xff] %v160
    %264 = vst [vmem:[#allocation2 + $0x8] sm:$0xff] %v162
    %265 = vst [vmem:[#allocation2 + $0x10] sm:$0xff] %v233
    %266 = vst [vmem:[#allocation2 + $0x18] sm:$0xff] %v164
    %267 = vst [vmem:[#allocation2 + $0x20] sm:$0xff] %v166
    %268 = vst [vmem:[#allocation2 + $0x28] sm:$0xff] %v236
    %269 = vst [vmem:[#allocation2 + $0x30] sm:$0xff] %v170
    %270 = vst [vmem:[#allocation2 + $0x38] sm:$0xff] %v172
    %271 = vst [vmem:[#allocation2 + $0x40] sm:$0xff] %v241
    %272 = vst [vmem:[#allocation2 + $0x48] sm:$0xff] %v174
    %273 = vst [vmem:[#allocation2 + $0x50] sm:$0xff] %v176
    %274 = vst [vmem:[#allocation2 + $0x58] sm:$0xff] %v244
    %275 = vst [vmem:[#allocation2 + $0x60] sm:$0xff] %v180
    %276 = vst [vmem:[#allocation2 + $0x68] sm:$0xff] %v182
    %277 = vst [vmem:[#allocation2 + $0x70] sm:$0xff] %v249
    %278 = vst [vmem:[#allocation2 + $0x78] sm:$0xff] %v184
    %279 = vst [vmem:[#allocation2 + $0x80] sm:$0xff] %v186
    %280 = vst [vmem:[#allocation2 + $0x88] sm:$0xff] %v252
    %281 = vst [vmem:[#allocation2 + $0x90] sm:$0xff] %v190
    %282 = vst [vmem:[#allocation2 + $0x98] sm:$0xff] %v192
    %283 = vst [vmem:[#allocation2 + $0xa0] sm:$0xff] %v257
    %284 = vst [vmem:[#allocation2 + $0xa8] sm:$0xff] %v194
    %285 = vst [vmem:[#allocation2 + $0xb0] sm:$0xff] %v196
    %286 = vst [vmem:[#allocation2 + $0xb8] sm:$0xff] %v260
    %v287 = vld [vmem:[#allocation3] sm:$0xff]
    %v288 = vld [vmem:[#allocation3 + $0x8] sm:$0xf]
    %v289 = vld [vmem:[#allocation3 + $0xc] sm:$0xff]
    %v290 = vld [vmem:[#allocation3 + $0x14] sm:$0xf]
    %v291 = vld [vmem:[#allocation3 + $0x18] sm:$0xff]
    %v292 = vld [vmem:[#allocation3 + $0x20] sm:$0xf]
    %v293 = vld [vmem:[#allocation3 + $0x24] sm:$0xff]
    %v294 = vld [vmem:[#allocation3 + $0x2c] sm:$0xf]
    %v295 = vld [vmem:[#allocation3 + $0x30] sm:$0xff]
    %v296 = vld [vmem:[#allocation3 + $0x38] sm:$0xf]
    %v297 = vld [vmem:[#allocation3 + $0x3c] sm:$0xff]
    %v298 = vld [vmem:[#allocation3 + $0x44] sm:$0xf]
    %v299 = vld [vmem:[#allocation3 + $0x48] sm:$0xff]
    %v300 = vld [vmem:[#allocation3 + $0x50] sm:$0xf]
    %v301 = vld [vmem:[#allocation3 + $0x54] sm:$0xff]
    %v302 = vld [vmem:[#allocation3 + $0x5c] sm:$0xf]
    %v303 = vld [vmem:[#allocation3 + $0x60] sm:$0xff]
    %v304 = vld [vmem:[#allocation3 + $0x68] sm:$0xf]
    %v305 = vld [vmem:[#allocation3 + $0x6c] sm:$0xff]
    %v306 = vld [vmem:[#allocation3 + $0x74] sm:$0xf]
    %v307 = vld [vmem:[#allocation3 + $0x78] sm:$0xff]
    %v308 = vld [vmem:[#allocation3 + $0x80] sm:$0xf]
    %v309 = vld [vmem:[#allocation3 + $0x84] sm:$0xff]
    %v310 = vld [vmem:[#allocation3 + $0x8c] sm:$0xf]
    %v311 = vld [vmem:[#allocation3 + $0x90] sm:$0xff]
    %v312 = vld [vmem:[#allocation3 + $0x98] sm:$0xf]
    %v313 = vld [vmem:[#allocation3 + $0x9c] sm:$0xff]
    %v314 = vld [vmem:[#allocation3 + $0xa4] sm:$0xf]
    %v315 = vld [vmem:[#allocation3 + $0xa8] sm:$0xff]
    %v316 = vld [vmem:[#allocation3 + $0xb0] sm:$0xf]
    %v317 = vld [vmem:[#allocation3 + $0xb4] sm:$0xff]
    %v318 = vld [vmem:[#allocation3 + $0xbc] sm:$0xf]
    %v319 = vld [vmem:[%s5] sm:$0x7]
    %v321 = vlaneseq
    %v322 = vshrl.u32 %v321, 7
    %v323 = vsub.s32 0, %v322
    %v324 = vrot.slane %v319, %v323
    %v325 = vlaneseq
    %v326 = vshrl.u32 %v325, 7
    %v327 = vsub.s32 1, %v326
    %v328 = vrot.slane %v319, %v327
    %v329 = vlaneseq
    %v330 = vshrl.u32 %v329, 7
    %v331 = vsub.s32 2, %v330
    %v332 = vrot.slane %v319, %v331
    %v336 = vld [vmem:[%s1] sm:$0xff]
    %v337 = vld [vmem:[#allocation2] sm:$0xff]
    %v338 = vld [vmem:[#allocation2 + $0x8] sm:$0xff]
    %v339 = vld [vmem:[#allocation2 + $0x10] sm:$0xff]
    %v340 = vpack.c.bf16 %v336, %v336
    %v373 = vunpack.c.l.b16 %v287
    %v374 = vunpack.c.h.b16 %v287
    %v375 = vunpack.c.l.b16 %v288
    %v376 = vunpack.c.l.b16 %v289
    %v377 = vunpack.c.h.b16 %v289
    %v378 = vunpack.c.l.b16 %v290
    %v379 = vunpack.c.l.b16 %v291
    %v380 = vunpack.c.h.b16 %v291
    %v381 = vunpack.c.l.b16 %v292
    %v382 = vunpack.c.l.b16 %v293
    %v383 = vunpack.c.h.b16 %v293
    %v384 = vunpack.c.l.b16 %v294
    %v385 = vunpack.c.l.b16 %v295
    %v386 = vunpack.c.h.b16 %v295
    %v387 = vunpack.c.l.b16 %v296
    %v388 = vunpack.c.l.b16 %v297
    %v389 = vunpack.c.h.b16 %v297
    %v390 = vunpack.c.l.b16 %v298
    %v391 = vunpack.c.l.b16 %v299
    %v392 = vunpack.c.h.b16 %v299
    %v393 = vunpack.c.l.b16 %v300
    %v394 = vunpack.c.l.b16 %v301
    %v395 = vunpack.c.h.b16 %v301
    %v396 = vunpack.c.l.b16 %v302
    %v397 = vunpack.c.l.b16 %v303
    %v398 = vunpack.c.h.b16 %v303
    %v399 = vunpack.c.l.b16 %v304
    %v400 = vunpack.c.l.b16 %v305
    %v401 = vunpack.c.h.b16 %v305
    %v402 = vunpack.c.l.b16 %v306
    %v403 = vunpack.c.l.b16 %v307
    %v404 = vunpack.c.h.b16 %v307
    %v405 = vunpack.c.l.b16 %v308
    %v406 = vunpack.c.l.b16 %v309
    %v407 = vunpack.c.h.b16 %v309
    %v408 = vunpack.c.l.b16 %v310
    %v409 = vunpack.c.l.b16 %v311
    %v410 = vunpack.c.h.b16 %v311
    %v411 = vunpack.c.l.b16 %v312
    %v412 = vunpack.c.l.b16 %v313
    %v413 = vunpack.c.h.b16 %v313
    %v414 = vunpack.c.l.b16 %v314
    %v415 = vunpack.c.l.b16 %v315
    %v416 = vunpack.c.h.b16 %v315
    %v417 = vunpack.c.l.b16 %v316
    %v418 = vunpack.c.l.b16 %v317
    %v419 = vunpack.c.h.b16 %v317
    %v420 = vunpack.c.l.b16 %v318
    %v421 = vpack.c.b16 %v376, %v373
    %v422 = vpack.c.b16 %v377, %v374
    %v423 = vpack.c.b16 %v378, %v375
    %v424 = vpack.c.b16 %v382, %v379
    %v425 = vpack.c.b16 %v383, %v380
    %v426 = vpack.c.b16 %v384, %v381
    %v427 = vpack.c.b16 %v388, %v385
    %v428 = vpack.c.b16 %v389, %v386
    %v429 = vpack.c.b16 %v390, %v387
    %v430 = vpack.c.b16 %v394, %v391
    %v431 = vpack.c.b16 %v395, %v392
    %v432 = vpack.c.b16 %v396, %v393
    %v433 = vpack.c.b16 %v400, %v397
    %v434 = vpack.c.b16 %v401, %v398
    %v435 = vpack.c.b16 %v402, %v399
    %v436 = vpack.c.b16 %v406, %v403
    %v437 = vpack.c.b16 %v407, %v404
    %v438 = vpack.c.b16 %v408, %v405
    %v439 = vpack.c.b16 %v412, %v409
    %v440 = vpack.c.b16 %v413, %v410
    %v441 = vpack.c.b16 %v414, %v411
    %v442 = vpack.c.b16 %v418, %v415
    %v443 = vpack.c.b16 %v419, %v416
    %v444 = vpack.c.b16 %v420, %v417
    %469 = vmatprep.subr.bf16.mxu0 %v443
    %470 = vmatpush1.bf16.msra.mxu0 %v442
    %471 = vmatprep.subr.bf16.mxu0 %v440
    %472 = vmatpush1.bf16.msra.mxu0 %v439
    %473 = vmatprep.subr.bf16.mxu0 %v437
    %474 = vmatpush1.bf16.msra.mxu0 %v436
    %475 = vmatprep.subr.bf16.mxu0 %v434
    %476 = vmatpush1.bf16.msra.mxu0 %v433
    %477 = vmatprep.subr.bf16.mxu0 %v431
    %478 = vmatpush1.bf16.msra.mxu0 %v430
    %479 = vmatprep.subr.bf16.mxu0 %v428
    %480 = vmatpush1.bf16.msra.mxu0 %v427
    %481 = vmatprep.subr.bf16.mxu0 %v425
    %482 = vmatpush1.bf16.msra.mxu0 %v424
    %483 = vmatprep.subr.bf16.mxu0 %v422
    %484 = vmatpush1.bf16.msra.mxu0 %v421
    %485 = vmatprep.subr.bf16.mxu0 0
    %486 = vmatpush2.bf16.msra.mxu0 0
    %487 = vmatprep.subr.bf16.mxu0 0
    %488 = vmatpush2.bf16.msra.mxu0 0
    %489 = vmatprep.subr.bf16.mxu0 0
    %490 = vmatpush2.bf16.msra.mxu0 0
    %491 = vmatprep.subr.bf16.mxu0 0
    %492 = vmatpush2.bf16.msra.mxu0 0
    %493 = vmatprep.subr.bf16.mxu0 0
    %494 = vmatpush2.bf16.msra.mxu0 0
    %495 = vmatprep.subr.bf16.mxu0 0
    %496 = vmatpush2.bf16.msra.mxu0 0
    %497 = vmatprep.subr.bf16.mxu0 0
    %498 = vmatpush2.bf16.msra.mxu0 0
    %499 = vmatprep.subr.bf16.mxu0 0
    %500 = vmatpush2.bf16.msra.mxu0 0
    %501 = vmatprep.mubr.bf16.mxu0 0
    %502 = vmatmul.mubr.bf16.gmra.mxu0 %v340
    %v503 = vpop.f32.mrf.mxu0
    %v504 = vadd.f32 %v324, %v503
    %v505 = vpop.f32.mrf.mxu0
    %v506 = vadd.f32 %v328, %v505
    %v507 = vpop.f32.mrf.mxu0
    %v508 = vpop.f32.mrf.mxu0
    %509 = vdwg.mxu0
    %510 = vmatprep.subr.bf16.mxu0 0
    %511 = vmatpush1.bf16.msra.mxu0 %v444
    %512 = vmatprep.subr.bf16.mxu0 0
    %513 = vmatpush1.bf16.msra.mxu0 %v441
    %514 = vmatprep.subr.bf16.mxu0 0
    %515 = vmatpush1.bf16.msra.mxu0 %v438
    %516 = vmatprep.subr.bf16.mxu0 0
    %517 = vmatpush1.bf16.msra.mxu0 %v435
    %518 = vmatprep.subr.bf16.mxu0 0
    %519 = vmatpush1.bf16.msra.mxu0 %v432
    %520 = vmatprep.subr.bf16.mxu0 0
    %521 = vmatpush1.bf16.msra.mxu0 %v429
    %522 = vmatprep.subr.bf16.mxu0 0
    %523 = vmatpush1.bf16.msra.mxu0 %v426
    %524 = vmatprep.subr.bf16.mxu0 0
    %525 = vmatpush1.bf16.msra.mxu0 %v423
    %526 = vmatprep.subr.bf16.mxu0 0
    %527 = vmatpush2.bf16.msra.mxu0 0
    %528 = vmatprep.subr.bf16.mxu0 0
    %529 = vmatpush2.bf16.msra.mxu0 0
    %530 = vmatprep.subr.bf16.mxu0 0
    %531 = vmatpush2.bf16.msra.mxu0 0
    %532 = vmatprep.subr.bf16.mxu0 0
    %533 = vmatpush2.bf16.msra.mxu0 0
    %534 = vmatprep.subr.bf16.mxu0 0
    %535 = vmatpush2.bf16.msra.mxu0 0
    %536 = vmatprep.subr.bf16.mxu0 0
    %537 = vmatpush2.bf16.msra.mxu0 0
    %538 = vmatprep.subr.bf16.mxu0 0
    %539 = vmatpush2.bf16.msra.mxu0 0
    %540 = vmatprep.subr.bf16.mxu0 0
    %541 = vmatpush2.bf16.msra.mxu0 0
    %542 = vmatprep.mubr.bf16.mxu0 0
    %543 = vmatmul.mubr.bf16.gmra.mxu0 %v340
    %v544 = vpop.f32.mrf.mxu0
    %v545 = vadd.f32 %v332, %v544
    %v546 = vpop.f32.mrf.mxu0
    %v547 = vpop.f32.mrf.mxu0
    %v548 = vpop.f32.mrf.mxu0
    %549 = vdwg.mxu0
    %v550 = vadd.f32 %v337, %v504
    %v551 = vadd.f32 %v338, %v506
    %v552 = vxor.u32 %v550, 2147483648
    %v553 = vxor.u32 %v551, 2147483648
    %v554 = vmul.f32 %v552, 1.442695
    %v555 = vpow.pop %v554
    %v556 = vmul.f32 %v553, 1.442695
    %v557 = vpow.pop %v556
    %v558 = vadd.f32 %v555, 1.0
    %v559 = vadd.f32 %v557, 1.0
    %v560 = vrcp.pop %v558
    %v561 = vmul.f32 1.0, %v560
    %v562 = vrcp.pop %v559
    %v563 = vmul.f32 1.0, %v562
    %v564 = vmul.f32 %v561, %v545
    %v565 = vadd.f32 %v339, %v564
    %v566 = vtanh.pop %v565
    %v567 = vsub.f32 1.0, %v563
    %v568 = vmul.f32 %v567, %v566
    %v569 = vmul.f32 %v563, %v336
    %v570 = vadd.f32 %v568, %v569
    %571 = vst [vmem:[#allocation6] sm:$0xff] %v570
    %v572 = vld [vmem:[#allocation2 + $0x18] sm:$0xff]
    %v573 = vld [vmem:[#allocation2 + $0x20] sm:$0xff]
    %v574 = vld [vmem:[#allocation2 + $0x28] sm:$0xff]
    %v575 = vpack.c.bf16 %v570, %v570
    %576 = vmatprep.subr.bf16.mxu0 %v443
    %577 = vmatpush1.bf16.msra.mxu0 %v442
    %578 = vmatprep.subr.bf16.mxu0 %v440
    %579 = vmatpush1.bf16.msra.mxu0 %v439
    %580 = vmatprep.subr.bf16.mxu0 %v437
    %581 = vmatpush1.bf16.msra.mxu0 %v436
    %582 = vmatprep.subr.bf16.mxu0 %v434
    %583 = vmatpush1.bf16.msra.mxu0 %v433
    %584 = vmatprep.subr.bf16.mxu0 %v431
    %585 = vmatpush1.bf16.msra.mxu0 %v430
    %586 = vmatprep.subr.bf16.mxu0 %v428
    %587 = vmatpush1.bf16.msra.mxu0 %v427
    %588 = vmatprep.subr.bf16.mxu0 %v425
    %589 = vmatpush1.bf16.msra.mxu0 %v424
    %590 = vmatprep.subr.bf16.mxu0 %v422
    %591 = vmatpush1.bf16.msra.mxu0 %v421
    %592 = vmatprep.subr.bf16.mxu0 0
    %593 = vmatpush2.bf16.msra.mxu0 0
    %594 = vmatprep.subr.bf16.mxu0 0
    %595 = vmatpush2.bf16.msra.mxu0 0
    %596 = vmatprep.subr.bf16.mxu0 0
    %597 = vmatpush2.bf16.msra.mxu0 0
    %598 = vmatprep.subr.bf16.mxu0 0
    %599 = vmatpush2.bf16.msra.mxu0 0
    %600 = vmatprep.subr.bf16.mxu0 0
    %601 = vmatpush2.bf16.msra.mxu0 0
    %602 = vmatprep.subr.bf16.mxu0 0
    %603 = vmatpush2.bf16.msra.mxu0 0
    %604 = vmatprep.subr.bf16.mxu0 0
    %605 = vmatpush2.bf16.msra.mxu0 0
    %606 = vmatprep.subr.bf16.mxu0 0
    %607 = vmatpush2.bf16.msra.mxu0 0
    %608 = vmatprep.mubr.bf16.mxu0 0
    %609 = vmatmul.mubr.bf16.gmra.mxu0 %v575
    %v610 = vpop.f32.mrf.mxu0
    %v611 = vadd.f32 %v324, %v610
    %v612 = vpop.f32.mrf.mxu0
    %v613 = vadd.f32 %v328, %v612
    %v614 = vpop.f32.mrf.mxu0
    %v615 = vpop.f32.mrf.mxu0
    %616 = vdwg.mxu0
    %617 = vmatprep.subr.bf16.mxu0 0
    %618 = vmatpush1.bf16.msra.mxu0 %v444
    %619 = vmatprep.subr.bf16.mxu0 0
    %620 = vmatpush1.bf16.msra.mxu0 %v441
    %621 = vmatprep.subr.bf16.mxu0 0
    %622 = vmatpush1.bf16.msra.mxu0 %v438
    %623 = vmatprep.subr.bf16.mxu0 0
    %624 = vmatpush1.bf16.msra.mxu0 %v435
    %625 = vmatprep.subr.bf16.mxu0 0
    %626 = vmatpush1.bf16.msra.mxu0 %v432
    %627 = vmatprep.subr.bf16.mxu0 0
    %628 = vmatpush1.bf16.msra.mxu0 %v429
    %629 = vmatprep.subr.bf16.mxu0 0
    %630 = vmatpush1.bf16.msra.mxu0 %v426
    %631 = vmatprep.subr.bf16.mxu0 0
    %632 = vmatpush1.bf16.msra.mxu0 %v423
    %633 = vmatprep.subr.bf16.mxu0 0
    %634 = vmatpush2.bf16.msra.mxu0 0
    %635 = vmatprep.subr.bf16.mxu0 0
    %636 = vmatpush2.bf16.msra.mxu0 0
    %637 = vmatprep.subr.bf16.mxu0 0
    %638 = vmatpush2.bf16.msra.mxu0 0
    %639 = vmatprep.subr.bf16.mxu0 0
    %640 = vmatpush2.bf16.msra.mxu0 0
    %641 = vmatprep.subr.bf16.mxu0 0
    %642 = vmatpush2.bf16.msra.mxu0 0
    %643 = vmatprep.subr.bf16.mxu0 0
    %644 = vmatpush2.bf16.msra.mxu0 0
    %645 = vmatprep.subr.bf16.mxu0 0
    %646 = vmatpush2.bf16.msra.mxu0 0
    %647 = vmatprep.subr.bf16.mxu0 0
    %648 = vmatpush2.bf16.msra.mxu0 0
    %649 = vmatprep.mubr.bf16.mxu0 0
    %650 = vmatmul.mubr.bf16.gmra.mxu0 %v575
    %v651 = vpop.f32.mrf.mxu0
    %v652 = vadd.f32 %v332, %v651
    %v653 = vpop.f32.mrf.mxu0
    %v654 = vpop.f32.mrf.mxu0
    %v655 = vpop.f32.mrf.mxu0
    %656 = vdwg.mxu0
    %v657 = vadd.f32 %v572, %v611
    %v658 = vadd.f32 %v573, %v613
    %v659 = vxor.u32 %v657, 2147483648
    %v660 = vxor.u32 %v658, 2147483648
    %v661 = vmul.f32 %v659, 1.442695
    %v662 = vpow.pop %v661
    %v663 = vmul.f32 %v660, 1.442695
    %v664 = vpow.pop %v663
    %v665 = vadd.f32 %v662, 1.0
    %v666 = vadd.f32 %v664, 1.0
    %v667 = vrcp.pop %v665
    %v668 = vmul.f32 1.0, %v667
    %v669 = vrcp.pop %v666
    %v670 = vmul.f32 1.0, %v669
    %v671 = vmul.f32 %v668, %v652
    %v672 = vadd.f32 %v574, %v671
    %v673 = vtanh.pop %v672
    %v674 = vsub.f32 1.0, %v670
    %v675 = vmul.f32 %v674, %v673
    %v676 = vmul.f32 %v670, %v570
    %v677 = vadd.f32 %v675, %v676
    %678 = vst [vmem:[#allocation6 + $0x8] sm:$0xff] %v677
    %v679 = vld [vmem:[#allocation2 + $0x30] sm:$0xff]
    %v680 = vld [vmem:[#allocation2 + $0x38] sm:$0xff]
    %v681 = vld [vmem:[#allocation2 + $0x40] sm:$0xff]
    %v682 = vpack.c.bf16 %v677, %v677
    %683 = vmatprep.subr.bf16.mxu0 %v443
    %684 = vmatpush1.bf16.msra.mxu0 %v442
    %685 = vmatprep.subr.bf16.mxu0 %v440
    %686 = vmatpush1.bf16.msra.mxu0 %v439
    %687 = vmatprep.subr.bf16.mxu0 %v437
    %688 = vmatpush1.bf16.msra.mxu0 %v436
    %689 = vmatprep.subr.bf16.mxu0 %v434
    %690 = vmatpush1.bf16.msra.mxu0 %v433
    %691 = vmatprep.subr.bf16.mxu0 %v431
    %692 = vmatpush1.bf16.msra.mxu0 %v430
    %693 = vmatprep.subr.bf16.mxu0 %v428
    %694 = vmatpush1.bf16.msra.mxu0 %v427
    %695 = vmatprep.subr.bf16.mxu0 %v425
    %696 = vmatpush1.bf16.msra.mxu0 %v424
    %697 = vmatprep.subr.bf16.mxu0 %v422
    %698 = vmatpush1.bf16.msra.mxu0 %v421
    %699 = vmatprep.subr.bf16.mxu0 0
    %700 = vmatpush2.bf16.msra.mxu0 0
    %701 = vmatprep.subr.bf16.mxu0 0
    %702 = vmatpush2.bf16.msra.mxu0 0
    %703 = vmatprep.subr.bf16.mxu0 0
    %704 = vmatpush2.bf16.msra.mxu0 0
    %705 = vmatprep.subr.bf16.mxu0 0
    %706 = vmatpush2.bf16.msra.mxu0 0
    %707 = vmatprep.subr.bf16.mxu0 0
    %708 = vmatpush2.bf16.msra.mxu0 0
    %709 = vmatprep.subr.bf16.mxu0 0
    %710 = vmatpush2.bf16.msra.mxu0 0
    %711 = vmatprep.subr.bf16.mxu0 0
    %712 = vmatpush2.bf16.msra.mxu0 0
    %713 = vmatprep.subr.bf16.mxu0 0
    %714 = vmatpush2.bf16.msra.mxu0 0
    %715 = vmatprep.mubr.bf16.mxu0 0
    %716 = vmatmul.mubr.bf16.gmra.mxu0 %v682
    %v717 = vpop.f32.mrf.mxu0
    %v718 = vadd.f32 %v324, %v717
    %v719 = vpop.f32.mrf.mxu0
    %v720 = vadd.f32 %v328, %v719
    %v721 = vpop.f32.mrf.mxu0
    %v722 = vpop.f32.mrf.mxu0
    %723 = vdwg.mxu0
    %724 = vmatprep.subr.bf16.mxu0 0
    %725 = vmatpush1.bf16.msra.mxu0 %v444
    %726 = vmatprep.subr.bf16.mxu0 0
    %727 = vmatpush1.bf16.msra.mxu0 %v441
    %728 = vmatprep.subr.bf16.mxu0 0
    %729 = vmatpush1.bf16.msra.mxu0 %v438
    %730 = vmatprep.subr.bf16.mxu0 0
    %731 = vmatpush1.bf16.msra.mxu0 %v435
    %732 = vmatprep.subr.bf16.mxu0 0
    %733 = vmatpush1.bf16.msra.mxu0 %v432
    %734 = vmatprep.subr.bf16.mxu0 0
    %735 = vmatpush1.bf16.msra.mxu0 %v429
    %736 = vmatprep.subr.bf16.mxu0 0
    %737 = vmatpush1.bf16.msra.mxu0 %v426
    %738 = vmatprep.subr.bf16.mxu0 0
    %739 = vmatpush1.bf16.msra.mxu0 %v423
    %740 = vmatprep.subr.bf16.mxu0 0
    %741 = vmatpush2.bf16.msra.mxu0 0
    %742 = vmatprep.subr.bf16.mxu0 0
    %743 = vmatpush2.bf16.msra.mxu0 0
    %744 = vmatprep.subr.bf16.mxu0 0
    %745 = vmatpush2.bf16.msra.mxu0 0
    %746 = vmatprep.subr.bf16.mxu0 0
    %747 = vmatpush2.bf16.msra.mxu0 0
    %748 = vmatprep.subr.bf16.mxu0 0
    %749 = vmatpush2.bf16.msra.mxu0 0
    %750 = vmatprep.subr.bf16.mxu0 0
    %751 = vmatpush2.bf16.msra.mxu0 0
    %752 = vmatprep.subr.bf16.mxu0 0
    %753 = vmatpush2.bf16.msra.mxu0 0
    %754 = vmatprep.subr.bf16.mxu0 0
    %755 = vmatpush2.bf16.msra.mxu0 0
    %756 = vmatprep.mubr.bf16.mxu0 0
    %757 = vmatmul.mubr.bf16.gmra.mxu0 %v682
    %v758 = vpop.f32.mrf.mxu0
    %v759 = vadd.f32 %v332, %v758
    %v760 = vpop.f32.mrf.mxu0
    %v761 = vpop.f32.mrf.mxu0
    %v762 = vpop.f32.mrf.mxu0
    %763 = vdwg.mxu0
    %v764 = vadd.f32 %v679, %v718
    %v765 = vadd.f32 %v680, %v720
    %v766 = vxor.u32 %v764, 2147483648
    %v767 = vxor.u32 %v765, 2147483648
    %v768 = vmul.f32 %v766, 1.442695
    %v769 = vpow.pop %v768
    %v770 = vmul.f32 %v767, 1.442695
    %v771 = vpow.pop %v770
    %v772 = vadd.f32 %v769, 1.0
    %v773 = vadd.f32 %v771, 1.0
    %v774 = vrcp.pop %v772
    %v775 = vmul.f32 1.0, %v774
    %v776 = vrcp.pop %v773
    %v777 = vmul.f32 1.0, %v776
    %v778 = vmul.f32 %v775, %v759
    %v779 = vadd.f32 %v681, %v778
    %v780 = vtanh.pop %v779
    %v781 = vsub.f32 1.0, %v777
    %v782 = vmul.f32 %v781, %v780
    %v783 = vmul.f32 %v777, %v677
    %v784 = vadd.f32 %v782, %v783
    %785 = vst [vmem:[#allocation6 + $0x10] sm:$0xff] %v784
    %v786 = vld [vmem:[#allocation2 + $0x48] sm:$0xff]
    %v787 = vld [vmem:[#allocation2 + $0x50] sm:$0xff]
    %v788 = vld [vmem:[#allocation2 + $0x58] sm:$0xff]
    %v789 = vpack.c.bf16 %v784, %v784
    %790 = vmatprep.subr.bf16.mxu0 %v443
    %791 = vmatpush1.bf16.msra.mxu0 %v442
    %792 = vmatprep.subr.bf16.mxu0 %v440
    %793 = vmatpush1.bf16.msra.mxu0 %v439
    %794 = vmatprep.subr.bf16.mxu0 %v437
    %795 = vmatpush1.bf16.msra.mxu0 %v436
    %796 = vmatprep.subr.bf16.mxu0 %v434
    %797 = vmatpush1.bf16.msra.mxu0 %v433
    %798 = vmatprep.subr.bf16.mxu0 %v431
    %799 = vmatpush1.bf16.msra.mxu0 %v430
    %800 = vmatprep.subr.bf16.mxu0 %v428
    %801 = vmatpush1.bf16.msra.mxu0 %v427
    %802 = vmatprep.subr.bf16.mxu0 %v425
    %803 = vmatpush1.bf16.msra.mxu0 %v424
    %804 = vmatprep.subr.bf16.mxu0 %v422
    %805 = vmatpush1.bf16.msra.mxu0 %v421
    %806 = vmatprep.subr.bf16.mxu0 0
    %807 = vmatpush2.bf16.msra.mxu0 0
    %808 = vmatprep.subr.bf16.mxu0 0
    %809 = vmatpush2.bf16.msra.mxu0 0
    %810 = vmatprep.subr.bf16.mxu0 0
    %811 = vmatpush2.bf16.msra.mxu0 0
    %812 = vmatprep.subr.bf16.mxu0 0
    %813 = vmatpush2.bf16.msra.mxu0 0
    %814 = vmatprep.subr.bf16.mxu0 0
    %815 = vmatpush2.bf16.msra.mxu0 0
    %816 = vmatprep.subr.bf16.mxu0 0
    %817 = vmatpush2.bf16.msra.mxu0 0
    %818 = vmatprep.subr.bf16.mxu0 0
    %819 = vmatpush2.bf16.msra.mxu0 0
    %820 = vmatprep.subr.bf16.mxu0 0
    %821 = vmatpush2.bf16.msra.mxu0 0
    %822 = vmatprep.mubr.bf16.mxu0 0
    %823 = vmatmul.mubr.bf16.gmra.mxu0 %v789
    %v824 = vpop.f32.mrf.mxu0
    %v825 = vadd.f32 %v324, %v824
    %v826 = vpop.f32.mrf.mxu0
    %v827 = vadd.f32 %v328, %v826
    %v828 = vpop.f32.mrf.mxu0
    %v829 = vpop.f32.mrf.mxu0
    %830 = vdwg.mxu0
    %831 = vmatprep.subr.bf16.mxu0 0
    %832 = vmatpush1.bf16.msra.mxu0 %v444
    %833 = vmatprep.subr.bf16.mxu0 0
    %834 = vmatpush1.bf16.msra.mxu0 %v441
    %835 = vmatprep.subr.bf16.mxu0 0
    %836 = vmatpush1.bf16.msra.mxu0 %v438
    %837 = vmatprep.subr.bf16.mxu0 0
    %838 = vmatpush1.bf16.msra.mxu0 %v435
    %839 = vmatprep.subr.bf16.mxu0 0
    %840 = vmatpush1.bf16.msra.mxu0 %v432
    %841 = vmatprep.subr.bf16.mxu0 0
    %842 = vmatpush1.bf16.msra.mxu0 %v429
    %843 = vmatprep.subr.bf16.mxu0 0
    %844 = vmatpush1.bf16.msra.mxu0 %v426
    %845 = vmatprep.subr.bf16.mxu0 0
    %846 = vmatpush1.bf16.msra.mxu0 %v423
    %847 = vmatprep.subr.bf16.mxu0 0
    %848 = vmatpush2.bf16.msra.mxu0 0
    %849 = vmatprep.subr.bf16.mxu0 0
    %850 = vmatpush2.bf16.msra.mxu0 0
    %851 = vmatprep.subr.bf16.mxu0 0
    %852 = vmatpush2.bf16.msra.mxu0 0
    %853 = vmatprep.subr.bf16.mxu0 0
    %854 = vmatpush2.bf16.msra.mxu0 0
    %855 = vmatprep.subr.bf16.mxu0 0
    %856 = vmatpush2.bf16.msra.mxu0 0
    %857 = vmatprep.subr.bf16.mxu0 0
    %858 = vmatpush2.bf16.msra.mxu0 0
    %859 = vmatprep.subr.bf16.mxu0 0
    %860 = vmatpush2.bf16.msra.mxu0 0
    %861 = vmatprep.subr.bf16.mxu0 0
    %862 = vmatpush2.bf16.msra.mxu0 0
    %863 = vmatprep.mubr.bf16.mxu0 0
    %864 = vmatmul.mubr.bf16.gmra.mxu0 %v789
    %v865 = vpop.f32.mrf.mxu0
    %v866 = vadd.f32 %v332, %v865
    %v867 = vpop.f32.mrf.mxu0
    %v868 = vpop.f32.mrf.mxu0
    %v869 = vpop.f32.mrf.mxu0
    %870 = vdwg.mxu0
    %v871 = vadd.f32 %v786, %v825
    %v872 = vadd.f32 %v787, %v827
    %v873 = vxor.u32 %v871, 2147483648
    %v874 = vxor.u32 %v872, 2147483648
    %v875 = vmul.f32 %v873, 1.442695
    %v876 = vpow.pop %v875
    %v877 = vmul.f32 %v874, 1.442695
    %v878 = vpow.pop %v877
    %v879 = vadd.f32 %v876, 1.0
    %v880 = vadd.f32 %v878, 1.0
    %v881 = vrcp.pop %v879
    %v882 = vmul.f32 1.0, %v881
    %v883 = vrcp.pop %v880
    %v884 = vmul.f32 1.0, %v883
    %v885 = vmul.f32 %v882, %v866
    %v886 = vadd.f32 %v788, %v885
    %v887 = vtanh.pop %v886
    %v888 = vsub.f32 1.0, %v884
    %v889 = vmul.f32 %v888, %v887
    %v890 = vmul.f32 %v884, %v784
    %v891 = vadd.f32 %v889, %v890
    %892 = vst [vmem:[#allocation6 + $0x18] sm:$0xff] %v891
    %v893 = vld [vmem:[#allocation2 + $0x60] sm:$0xff]
    %v894 = vld [vmem:[#allocation2 + $0x68] sm:$0xff]
    %v895 = vld [vmem:[#allocation2 + $0x70] sm:$0xff]
    %v896 = vpack.c.bf16 %v891, %v891
    %897 = vmatprep.subr.bf16.mxu0 %v443
    %898 = vmatpush1.bf16.msra.mxu0 %v442
    %899 = vmatprep.subr.bf16.mxu0 %v440
    %900 = vmatpush1.bf16.msra.mxu0 %v439
    %901 = vmatprep.subr.bf16.mxu0 %v437
    %902 = vmatpush1.bf16.msra.mxu0 %v436
    %903 = vmatprep.subr.bf16.mxu0 %v434
    %904 = vmatpush1.bf16.msra.mxu0 %v433
    %905 = vmatprep.subr.bf16.mxu0 %v431
    %906 = vmatpush1.bf16.msra.mxu0 %v430
    %907 = vmatprep.subr.bf16.mxu0 %v428
    %908 = vmatpush1.bf16.msra.mxu0 %v427
    %909 = vmatprep.subr.bf16.mxu0 %v425
    %910 = vmatpush1.bf16.msra.mxu0 %v424
    %911 = vmatprep.subr.bf16.mxu0 %v422
    %912 = vmatpush1.bf16.msra.mxu0 %v421
    %913 = vmatprep.subr.bf16.mxu0 0
    %914 = vmatpush2.bf16.msra.mxu0 0
    %915 = vmatprep.subr.bf16.mxu0 0
    %916 = vmatpush2.bf16.msra.mxu0 0
    %917 = vmatprep.subr.bf16.mxu0 0
    %918 = vmatpush2.bf16.msra.mxu0 0
    %919 = vmatprep.subr.bf16.mxu0 0
    %920 = vmatpush2.bf16.msra.mxu0 0
    %921 = vmatprep.subr.bf16.mxu0 0
    %922 = vmatpush2.bf16.msra.mxu0 0
    %923 = vmatprep.subr.bf16.mxu0 0
    %924 = vmatpush2.bf16.msra.mxu0 0
    %925 = vmatprep.subr.bf16.mxu0 0
    %926 = vmatpush2.bf16.msra.mxu0 0
    %927 = vmatprep.subr.bf16.mxu0 0
    %928 = vmatpush2.bf16.msra.mxu0 0
    %929 = vmatprep.mubr.bf16.mxu0 0
    %930 = vmatmul.mubr.bf16.gmra.mxu0 %v896
    %v931 = vpop.f32.mrf.mxu0
    %v932 = vadd.f32 %v324, %v931
    %v933 = vpop.f32.mrf.mxu0
    %v934 = vadd.f32 %v328, %v933
    %v935 = vpop.f32.mrf.mxu0
    %v936 = vpop.f32.mrf.mxu0
    %937 = vdwg.mxu0
    %938 = vmatprep.subr.bf16.mxu0 0
    %939 = vmatpush1.bf16.msra.mxu0 %v444
    %940 = vmatprep.subr.bf16.mxu0 0
    %941 = vmatpush1.bf16.msra.mxu0 %v441
    %942 = vmatprep.subr.bf16.mxu0 0
    %943 = vmatpush1.bf16.msra.mxu0 %v438
    %944 = vmatprep.subr.bf16.mxu0 0
    %945 = vmatpush1.bf16.msra.mxu0 %v435
    %946 = vmatprep.subr.bf16.mxu0 0
    %947 = vmatpush1.bf16.msra.mxu0 %v432
    %948 = vmatprep.subr.bf16.mxu0 0
    %949 = vmatpush1.bf16.msra.mxu0 %v429
    %950 = vmatprep.subr.bf16.mxu0 0
    %951 = vmatpush1.bf16.msra.mxu0 %v426
    %952 = vmatprep.subr.bf16.mxu0 0
    %953 = vmatpush1.bf16.msra.mxu0 %v423
    %954 = vmatprep.subr.bf16.mxu0 0
    %955 = vmatpush2.bf16.msra.mxu0 0
    %956 = vmatprep.subr.bf16.mxu0 0
    %957 = vmatpush2.bf16.msra.mxu0 0
    %958 = vmatprep.subr.bf16.mxu0 0
    %959 = vmatpush2.bf16.msra.mxu0 0
    %960 = vmatprep.subr.bf16.mxu0 0
    %961 = vmatpush2.bf16.msra.mxu0 0
    %962 = vmatprep.subr.bf16.mxu0 0
    %963 = vmatpush2.bf16.msra.mxu0 0
    %964 = vmatprep.subr.bf16.mxu0 0
    %965 = vmatpush2.bf16.msra.mxu0 0
    %966 = vmatprep.subr.bf16.mxu0 0
    %967 = vmatpush2.bf16.msra.mxu0 0
    %968 = vmatprep.subr.bf16.mxu0 0
    %969 = vmatpush2.bf16.msra.mxu0 0
    %970 = vmatprep.mubr.bf16.mxu0 0
    %971 = vmatmul.mubr.bf16.gmra.mxu0 %v896
    %v972 = vpop.f32.mrf.mxu0
    %v973 = vadd.f32 %v332, %v972
    %v974 = vpop.f32.mrf.mxu0
    %v975 = vpop.f32.mrf.mxu0
    %v976 = vpop.f32.mrf.mxu0
    %977 = vdwg.mxu0
    %v978 = vadd.f32 %v893, %v932
    %v979 = vadd.f32 %v894, %v934
    %v980 = vxor.u32 %v978, 2147483648
    %v981 = vxor.u32 %v979, 2147483648
    %v982 = vmul.f32 %v980, 1.442695
    %v983 = vpow.pop %v982
    %v984 = vmul.f32 %v981, 1.442695
    %v985 = vpow.pop %v984
    %v986 = vadd.f32 %v983, 1.0
    %v987 = vadd.f32 %v985, 1.0
    %v988 = vrcp.pop %v986
    %v989 = vmul.f32 1.0, %v988
    %v990 = vrcp.pop %v987
    %v991 = vmul.f32 1.0, %v990
    %v992 = vmul.f32 %v989, %v973
    %v993 = vadd.f32 %v895, %v992
    %v994 = vtanh.pop %v993
    %v995 = vsub.f32 1.0, %v991
    %v996 = vmul.f32 %v995, %v994
    %v997 = vmul.f32 %v991, %v891
    %v998 = vadd.f32 %v996, %v997
    %999 = vst [vmem:[#allocation6 + $0x20] sm:$0xff] %v998
    %v1000 = vld [vmem:[#allocation2 + $0x78] sm:$0xff]
    %v1001 = vld [vmem:[#allocation2 + $0x80] sm:$0xff]
    %v1002 = vld [vmem:[#allocation2 + $0x88] sm:$0xff]
    %v1003 = vpack.c.bf16 %v998, %v998
    %1004 = vmatprep.subr.bf16.mxu0 %v443
    %1005 = vmatpush1.bf16.msra.mxu0 %v442
    %1006 = vmatprep.subr.bf16.mxu0 %v440
    %1007 = vmatpush1.bf16.msra.mxu0 %v439
    %1008 = vmatprep.subr.bf16.mxu0 %v437
    %1009 = vmatpush1.bf16.msra.mxu0 %v436
    %1010 = vmatprep.subr.bf16.mxu0 %v434
    %1011 = vmatpush1.bf16.msra.mxu0 %v433
    %1012 = vmatprep.subr.bf16.mxu0 %v431
    %1013 = vmatpush1.bf16.msra.mxu0 %v430
    %1014 = vmatprep.subr.bf16.mxu0 %v428
    %1015 = vmatpush1.bf16.msra.mxu0 %v427
    %1016 = vmatprep.subr.bf16.mxu0 %v425
    %1017 = vmatpush1.bf16.msra.mxu0 %v424
    %1018 = vmatprep.subr.bf16.mxu0 %v422
    %1019 = vmatpush1.bf16.msra.mxu0 %v421
    %1020 = vmatprep.subr.bf16.mxu0 0
    %1021 = vmatpush2.bf16.msra.mxu0 0
    %1022 = vmatprep.subr.bf16.mxu0 0
    %1023 = vmatpush2.bf16.msra.mxu0 0
    %1024 = vmatprep.subr.bf16.mxu0 0
    %1025 = vmatpush2.bf16.msra.mxu0 0
    %1026 = vmatprep.subr.bf16.mxu0 0
    %1027 = vmatpush2.bf16.msra.mxu0 0
    %1028 = vmatprep.subr.bf16.mxu0 0
    %1029 = vmatpush2.bf16.msra.mxu0 0
    %1030 = vmatprep.subr.bf16.mxu0 0
    %1031 = vmatpush2.bf16.msra.mxu0 0
    %1032 = vmatprep.subr.bf16.mxu0 0
    %1033 = vmatpush2.bf16.msra.mxu0 0
    %1034 = vmatprep.subr.bf16.mxu0 0
    %1035 = vmatpush2.bf16.msra.mxu0 0
    %1036 = vmatprep.mubr.bf16.mxu0 0
    %1037 = vmatmul.mubr.bf16.gmra.mxu0 %v1003
    %v1038 = vpop.f32.mrf.mxu0
    %v1039 = vadd.f32 %v324, %v1038
    %v1040 = vpop.f32.mrf.mxu0
    %v1041 = vadd.f32 %v328, %v1040
    %v1042 = vpop.f32.mrf.mxu0
    %v1043 = vpop.f32.mrf.mxu0
    %1044 = vdwg.mxu0
    %1045 = vmatprep.subr.bf16.mxu0 0
    %1046 = vmatpush1.bf16.msra.mxu0 %v444
    %1047 = vmatprep.subr.bf16.mxu0 0
    %1048 = vmatpush1.bf16.msra.mxu0 %v441
    %1049 = vmatprep.subr.bf16.mxu0 0
    %1050 = vmatpush1.bf16.msra.mxu0 %v438
    %1051 = vmatprep.subr.bf16.mxu0 0
    %1052 = vmatpush1.bf16.msra.mxu0 %v435
    %1053 = vmatprep.subr.bf16.mxu0 0
    %1054 = vmatpush1.bf16.msra.mxu0 %v432
    %1055 = vmatprep.subr.bf16.mxu0 0
    %1056 = vmatpush1.bf16.msra.mxu0 %v429
    %1057 = vmatprep.subr.bf16.mxu0 0
    %1058 = vmatpush1.bf16.msra.mxu0 %v426
    %1059 = vmatprep.subr.bf16.mxu0 0
    %1060 = vmatpush1.bf16.msra.mxu0 %v423
    %1061 = vmatprep.subr.bf16.mxu0 0
    %1062 = vmatpush2.bf16.msra.mxu0 0
    %1063 = vmatprep.subr.bf16.mxu0 0
    %1064 = vmatpush2.bf16.msra.mxu0 0
    %1065 = vmatprep.subr.bf16.mxu0 0
    %1066 = vmatpush2.bf16.msra.mxu0 0
    %1067 = vmatprep.subr.bf16.mxu0 0
    %1068 = vmatpush2.bf16.msra.mxu0 0
    %1069 = vmatprep.subr.bf16.mxu0 0
    %1070 = vmatpush2.bf16.msra.mxu0 0
    %1071 = vmatprep.subr.bf16.mxu0 0
    %1072 = vmatpush2.bf16.msra.mxu0 0
    %1073 = vmatprep.subr.bf16.mxu0 0
    %1074 = vmatpush2.bf16.msra.mxu0 0
    %1075 = vmatprep.subr.bf16.mxu0 0
    %1076 = vmatpush2.bf16.msra.mxu0 0
    %1077 = vmatprep.mubr.bf16.mxu0 0
    %1078 = vmatmul.mubr.bf16.gmra.mxu0 %v1003
    %v1079 = vpop.f32.mrf.mxu0
    %v1080 = vadd.f32 %v332, %v1079
    %v1081 = vpop.f32.mrf.mxu0
    %v1082 = vpop.f32.mrf.mxu0
    %v1083 = vpop.f32.mrf.mxu0
    %1084 = vdwg.mxu0
    %v1085 = vadd.f32 %v1000, %v1039
    %v1086 = vadd.f32 %v1001, %v1041
    %v1087 = vxor.u32 %v1085, 2147483648
    %v1088 = vxor.u32 %v1086, 2147483648
    %v1089 = vmul.f32 %v1087, 1.442695
    %v1090 = vpow.pop %v1089
    %v1091 = vmul.f32 %v1088, 1.442695
    %v1092 = vpow.pop %v1091
    %v1093 = vadd.f32 %v1090, 1.0
    %v1094 = vadd.f32 %v1092, 1.0
    %v1095 = vrcp.pop %v1093
    %v1096 = vmul.f32 1.0, %v1095
    %v1097 = vrcp.pop %v1094
    %v1098 = vmul.f32 1.0, %v1097
    %v1099 = vmul.f32 %v1096, %v1080
    %v1100 = vadd.f32 %v1002, %v1099
    %v1101 = vtanh.pop %v1100
    %v1102 = vsub.f32 1.0, %v1098
    %v1103 = vmul.f32 %v1102, %v1101
    %v1104 = vmul.f32 %v1098, %v998
    %v1105 = vadd.f32 %v1103, %v1104
    %1106 = vst [vmem:[#allocation6 + $0x28] sm:$0xff] %v1105
    %v1107 = vld [vmem:[#allocation2 + $0x90] sm:$0xff]
    %v1108 = vld [vmem:[#allocation2 + $0x98] sm:$0xff]
    %v1109 = vld [vmem:[#allocation2 + $0xa0] sm:$0xff]
    %v1110 = vpack.c.bf16 %v1105, %v1105
    %1111 = vmatprep.subr.bf16.mxu0 %v443
    %1112 = vmatpush1.bf16.msra.mxu0 %v442
    %1113 = vmatprep.subr.bf16.mxu0 %v440
    %1114 = vmatpush1.bf16.msra.mxu0 %v439
    %1115 = vmatprep.subr.bf16.mxu0 %v437
    %1116 = vmatpush1.bf16.msra.mxu0 %v436
    %1117 = vmatprep.subr.bf16.mxu0 %v434
    %1118 = vmatpush1.bf16.msra.mxu0 %v433
    %1119 = vmatprep.subr.bf16.mxu0 %v431
    %1120 = vmatpush1.bf16.msra.mxu0 %v430
    %1121 = vmatprep.subr.bf16.mxu0 %v428
    %1122 = vmatpush1.bf16.msra.mxu0 %v427
    %1123 = vmatprep.subr.bf16.mxu0 %v425
    %1124 = vmatpush1.bf16.msra.mxu0 %v424
    %1125 = vmatprep.subr.bf16.mxu0 %v422
    %1126 = vmatpush1.bf16.msra.mxu0 %v421
    %1127 = vmatprep.subr.bf16.mxu0 0
    %1128 = vmatpush2.bf16.msra.mxu0 0
    %1129 = vmatprep.subr.bf16.mxu0 0
    %1130 = vmatpush2.bf16.msra.mxu0 0
    %1131 = vmatprep.subr.bf16.mxu0 0
    %1132 = vmatpush2.bf16.msra.mxu0 0
    %1133 = vmatprep.subr.bf16.mxu0 0
    %1134 = vmatpush2.bf16.msra.mxu0 0
    %1135 = vmatprep.subr.bf16.mxu0 0
    %1136 = vmatpush2.bf16.msra.mxu0 0
    %1137 = vmatprep.subr.bf16.mxu0 0
    %1138 = vmatpush2.bf16.msra.mxu0 0
    %1139 = vmatprep.subr.bf16.mxu0 0
    %1140 = vmatpush2.bf16.msra.mxu0 0
    %1141 = vmatprep.subr.bf16.mxu0 0
    %1142 = vmatpush2.bf16.msra.mxu0 0
    %1143 = vmatprep.mubr.bf16.mxu0 0
    %1144 = vmatmul.mubr.bf16.gmra.mxu0 %v1110
    %v1145 = vpop.f32.mrf.mxu0
    %v1146 = vadd.f32 %v324, %v1145
    %v1147 = vpop.f32.mrf.mxu0
    %v1148 = vadd.f32 %v328, %v1147
    %v1149 = vpop.f32.mrf.mxu0
    %v1150 = vpop.f32.mrf.mxu0
    %1151 = vdwg.mxu0
    %1152 = vmatprep.subr.bf16.mxu0 0
    %1153 = vmatpush1.bf16.msra.mxu0 %v444
    %1154 = vmatprep.subr.bf16.mxu0 0
    %1155 = vmatpush1.bf16.msra.mxu0 %v441
    %1156 = vmatprep.subr.bf16.mxu0 0
    %1157 = vmatpush1.bf16.msra.mxu0 %v438
    %1158 = vmatprep.subr.bf16.mxu0 0
    %1159 = vmatpush1.bf16.msra.mxu0 %v435
    %1160 = vmatprep.subr.bf16.mxu0 0
    %1161 = vmatpush1.bf16.msra.mxu0 %v432
    %1162 = vmatprep.subr.bf16.mxu0 0
    %1163 = vmatpush1.bf16.msra.mxu0 %v429
    %1164 = vmatprep.subr.bf16.mxu0 0
    %1165 = vmatpush1.bf16.msra.mxu0 %v426
    %1166 = vmatprep.subr.bf16.mxu0 0
    %1167 = vmatpush1.bf16.msra.mxu0 %v423
    %1168 = vmatprep.subr.bf16.mxu0 0
    %1169 = vmatpush2.bf16.msra.mxu0 0
    %1170 = vmatprep.subr.bf16.mxu0 0
    %1171 = vmatpush2.bf16.msra.mxu0 0
    %1172 = vmatprep.subr.bf16.mxu0 0
    %1173 = vmatpush2.bf16.msra.mxu0 0
    %1174 = vmatprep.subr.bf16.mxu0 0
    %1175 = vmatpush2.bf16.msra.mxu0 0
    %1176 = vmatprep.subr.bf16.mxu0 0
    %1177 = vmatpush2.bf16.msra.mxu0 0
    %1178 = vmatprep.subr.bf16.mxu0 0
    %1179 = vmatpush2.bf16.msra.mxu0 0
    %1180 = vmatprep.subr.bf16.mxu0 0
    %1181 = vmatpush2.bf16.msra.mxu0 0
    %1182 = vmatprep.subr.bf16.mxu0 0
    %1183 = vmatpush2.bf16.msra.mxu0 0
    %1184 = vmatprep.mubr.bf16.mxu0 0
    %1185 = vmatmul.mubr.bf16.gmra.mxu0 %v1110
    %v1186 = vpop.f32.mrf.mxu0
    %v1187 = vadd.f32 %v332, %v1186
    %v1188 = vpop.f32.mrf.mxu0
    %v1189 = vpop.f32.mrf.mxu0
    %v1190 = vpop.f32.mrf.mxu0
    %1191 = vdwg.mxu0
    %v1192 = vadd.f32 %v1107, %v1146
    %v1193 = vadd.f32 %v1108, %v1148
    %v1194 = vxor.u32 %v1192, 2147483648
    %v1195 = vxor.u32 %v1193, 2147483648
    %v1196 = vmul.f32 %v1194, 1.442695
    %v1197 = vpow.pop %v1196
    %v1198 = vmul.f32 %v1195, 1.442695
    %v1199 = vpow.pop %v1198
    %v1200 = vadd.f32 %v1197, 1.0
    %v1201 = vadd.f32 %v1199, 1.0
    %v1202 = vrcp.pop %v1200
    %v1203 = vmul.f32 1.0, %v1202
    %v1204 = vrcp.pop %v1201
    %v1205 = vmul.f32 1.0, %v1204
    %v1206 = vmul.f32 %v1203, %v1187
    %v1207 = vadd.f32 %v1109, %v1206
    %v1208 = vtanh.pop %v1207
    %v1209 = vsub.f32 1.0, %v1205
    %v1210 = vmul.f32 %v1209, %v1208
    %v1211 = vmul.f32 %v1205, %v1105
    %v1212 = vadd.f32 %v1210, %v1211
    %1213 = vst [vmem:[#allocation6 + $0x30] sm:$0xff] %v1212
    %v1214 = vld [vmem:[#allocation2 + $0xa8] sm:$0xff]
    %v1215 = vld [vmem:[#allocation2 + $0xb0] sm:$0xff]
    %v1216 = vld [vmem:[#allocation2 + $0xb8] sm:$0xff]
    %v1217 = vpack.c.bf16 %v1212, %v1212
    %1218 = vmatprep.subr.bf16.mxu0 %v443
    %1219 = vmatpush1.bf16.msra.mxu0 %v442
    %1220 = vmatprep.subr.bf16.mxu0 %v440
    %1221 = vmatpush1.bf16.msra.mxu0 %v439
    %1222 = vmatprep.subr.bf16.mxu0 %v437
    %1223 = vmatpush1.bf16.msra.mxu0 %v436
    %1224 = vmatprep.subr.bf16.mxu0 %v434
    %1225 = vmatpush1.bf16.msra.mxu0 %v433
    %1226 = vmatprep.subr.bf16.mxu0 %v431
    %1227 = vmatpush1.bf16.msra.mxu0 %v430
    %1228 = vmatprep.subr.bf16.mxu0 %v428
    %1229 = vmatpush1.bf16.msra.mxu0 %v427
    %1230 = vmatprep.subr.bf16.mxu0 %v425
    %1231 = vmatpush1.bf16.msra.mxu0 %v424
    %1232 = vmatprep.subr.bf16.mxu0 %v422
    %1233 = vmatpush1.bf16.msra.mxu0 %v421
    %1234 = vmatprep.subr.bf16.mxu0 0
    %1235 = vmatpush2.bf16.msra.mxu0 0
    %1236 = vmatprep.subr.bf16.mxu0 0
    %1237 = vmatpush2.bf16.msra.mxu0 0
    %1238 = vmatprep.subr.bf16.mxu0 0
    %1239 = vmatpush2.bf16.msra.mxu0 0
    %1240 = vmatprep.subr.bf16.mxu0 0
    %1241 = vmatpush2.bf16.msra.mxu0 0
    %1242 = vmatprep.subr.bf16.mxu0 0
    %1243 = vmatpush2.bf16.msra.mxu0 0
    %1244 = vmatprep.subr.bf16.mxu0 0
    %1245 = vmatpush2.bf16.msra.mxu0 0
    %1246 = vmatprep.subr.bf16.mxu0 0
    %1247 = vmatpush2.bf16.msra.mxu0 0
    %1248 = vmatprep.subr.bf16.mxu0 0
    %1249 = vmatpush2.bf16.msra.mxu0 0
    %1250 = vmatprep.mubr.bf16.mxu0 0
    %1251 = vmatmul.mubr.bf16.gmra.mxu0 %v1217
    %v1252 = vpop.f32.mrf.mxu0
    %v1253 = vadd.f32 %v324, %v1252
    %v1254 = vpop.f32.mrf.mxu0
    %v1255 = vadd.f32 %v328, %v1254
    %v1256 = vpop.f32.mrf.mxu0
    %v1257 = vpop.f32.mrf.mxu0
    %1258 = vdwg.mxu0
    %1259 = vmatprep.subr.bf16.mxu0 0
    %1260 = vmatpush1.bf16.msra.mxu0 %v444
    %1261 = vmatprep.subr.bf16.mxu0 0
    %1262 = vmatpush1.bf16.msra.mxu0 %v441
    %1263 = vmatprep.subr.bf16.mxu0 0
    %1264 = vmatpush1.bf16.msra.mxu0 %v438
    %1265 = vmatprep.subr.bf16.mxu0 0
    %1266 = vmatpush1.bf16.msra.mxu0 %v435
    %1267 = vmatprep.subr.bf16.mxu0 0
    %1268 = vmatpush1.bf16.msra.mxu0 %v432
    %1269 = vmatprep.subr.bf16.mxu0 0
    %1270 = vmatpush1.bf16.msra.mxu0 %v429
    %1271 = vmatprep.subr.bf16.mxu0 0
    %1272 = vmatpush1.bf16.msra.mxu0 %v426
    %1273 = vmatprep.subr.bf16.mxu0 0
    %1274 = vmatpush1.bf16.msra.mxu0 %v423
    %1275 = vmatprep.subr.bf16.mxu0 0
    %1276 = vmatpush2.bf16.msra.mxu0 0
    %1277 = vmatprep.subr.bf16.mxu0 0
    %1278 = vmatpush2.bf16.msra.mxu0 0
    %1279 = vmatprep.subr.bf16.mxu0 0
    %1280 = vmatpush2.bf16.msra.mxu0 0
    %1281 = vmatprep.subr.bf16.mxu0 0
    %1282 = vmatpush2.bf16.msra.mxu0 0
    %1283 = vmatprep.subr.bf16.mxu0 0
    %1284 = vmatpush2.bf16.msra.mxu0 0
    %1285 = vmatprep.subr.bf16.mxu0 0
    %1286 = vmatpush2.bf16.msra.mxu0 0
    %1287 = vmatprep.subr.bf16.mxu0 0
    %1288 = vmatpush2.bf16.msra.mxu0 0
    %1289 = vmatprep.subr.bf16.mxu0 0
    %1290 = vmatpush2.bf16.msra.mxu0 0
    %1291 = vmatprep.mubr.bf16.mxu0 0
    %1292 = vmatmul.mubr.bf16.gmra.mxu0 %v1217
    %v1293 = vpop.f32.mrf.mxu0
    %v1294 = vadd.f32 %v332, %v1293
    %v1295 = vpop.f32.mrf.mxu0
    %v1296 = vpop.f32.mrf.mxu0
    %v1297 = vpop.f32.mrf.mxu0
    %1298 = vdwg.mxu0
    %v1299 = vadd.f32 %v1214, %v1253
    %v1300 = vadd.f32 %v1215, %v1255
    %v1301 = vxor.u32 %v1299, 2147483648
    %v1302 = vxor.u32 %v1300, 2147483648
    %v1303 = vmul.f32 %v1301, 1.442695
    %v1304 = vpow.pop %v1303
    %v1305 = vmul.f32 %v1302, 1.442695
    %v1306 = vpow.pop %v1305
    %v1307 = vadd.f32 %v1304, 1.0
    %v1308 = vadd.f32 %v1306, 1.0
    %v1309 = vrcp.pop %v1307
    %v1310 = vmul.f32 1.0, %v1309
    %v1311 = vrcp.pop %v1308
    %v1312 = vmul.f32 1.0, %v1311
    %v1313 = vmul.f32 %v1310, %v1294
    %v1314 = vadd.f32 %v1216, %v1313
    %v1315 = vtanh.pop %v1314
    %v1316 = vsub.f32 1.0, %v1312
    %v1317 = vmul.f32 %v1316, %v1315
    %v1318 = vmul.f32 %v1312, %v1212
    %v1319 = vadd.f32 %v1317, %v1318
    %1320 = vst [vmem:[#allocation6 + $0x38] sm:$0xff] %v1319
    %v1321 = vld [vmem:[#allocation6] sm:$0xff]
    %v1322 = vld [vmem:[#allocation6 + $0x8] sm:$0xff]
    %v1323 = vld [vmem:[#allocation6 + $0x10] sm:$0xff]
    %v1324 = vld [vmem:[#allocation6 + $0x18] sm:$0xff]
    %v1325 = vld [vmem:[#allocation6 + $0x20] sm:$0xff]
    %v1326 = vld [vmem:[#allocation6 + $0x28] sm:$0xff]
    %v1327 = vld [vmem:[#allocation6 + $0x30] sm:$0xff]
    %v1328 = vld [vmem:[#allocation6 + $0x38] sm:$0xff]
    %v1329 = vpack.c.bf16 %v1322, %v1321
    %v1330 = vpack.c.bf16 %v1324, %v1323
    %v1331 = vpack.c.bf16 %v1326, %v1325
    %v1332 = vpack.c.bf16 %v1328, %v1327
    %v1333 = vld [vmem:[%s6] sm:$0xf]
    %v1334 = vld [vmem:[%s6 + $0x4] sm:$0xf]
    %v1335 = vld [vmem:[%s6 + $0x8] sm:$0xf]
    %v1336 = vld [vmem:[%s6 + $0xc] sm:$0xf]
    %v1337 = vld [vmem:[%s6 + $0x10] sm:$0xf]
    %v1338 = vld [vmem:[%s6 + $0x14] sm:$0xf]
    %v1339 = vld [vmem:[%s6 + $0x18] sm:$0xf]
    %v1340 = vld [vmem:[%s6 + $0x1c] sm:$0xf]
    %v1341 = vld [vmem:[%s6 + $0x20] sm:$0xf]
    %v1342 = vld [vmem:[%s6 + $0x24] sm:$0xf]
    %v1343 = vld [vmem:[%s6 + $0x28] sm:$0xf]
    %v1344 = vld [vmem:[%s6 + $0x2c] sm:$0xf]
    %v1345 = vld [vmem:[%s6 + $0x30] sm:$0xf]
    %v1346 = vld [vmem:[%s6 + $0x34] sm:$0xf]
    %v1347 = vld [vmem:[%s6 + $0x38] sm:$0xf]
    %v1348 = vld [vmem:[%s6 + $0x3c] sm:$0xf]
    %v1349 = vld [vmem:[%s7] sm:$0x1]
    %v1351 = vlaneseq
    %v1352 = vshrl.u32 %v1351, 7
    %v1353 = vsub.s32 0, %v1352
    %v1354 = vrot.slane %v1349, %v1353
    %v1372 = vunpack.c.l.b16 %v1333
    %v1373 = vunpack.c.l.b16 %v1334
    %v1374 = vunpack.c.l.b16 %v1335
    %v1375 = vunpack.c.l.b16 %v1336
    %v1376 = vunpack.c.l.b16 %v1337
    %v1377 = vunpack.c.l.b16 %v1338
    %v1378 = vunpack.c.l.b16 %v1339
    %v1379 = vunpack.c.l.b16 %v1340
    %v1380 = vunpack.c.l.b16 %v1341
    %v1381 = vunpack.c.l.b16 %v1342
    %v1382 = vunpack.c.l.b16 %v1343
    %v1383 = vunpack.c.l.b16 %v1344
    %v1384 = vunpack.c.l.b16 %v1345
    %v1385 = vunpack.c.l.b16 %v1346
    %v1386 = vunpack.c.l.b16 %v1347
    %v1387 = vunpack.c.l.b16 %v1348
    %v1388 = vpack.c.b16 %v1373, %v1372
    %v1389 = vpack.c.b16 %v1375, %v1374
    %v1390 = vpack.c.b16 %v1377, %v1376
    %v1391 = vpack.c.b16 %v1379, %v1378
    %v1392 = vpack.c.b16 %v1381, %v1380
    %v1393 = vpack.c.b16 %v1383, %v1382
    %v1394 = vpack.c.b16 %v1385, %v1384
    %v1395 = vpack.c.b16 %v1387, %v1386
    %1404 = vmatprep.subr.bf16.mxu0 0
    %1405 = vmatpush1.bf16.msra.mxu0 %v1395
    %1406 = vmatprep.subr.bf16.mxu0 0
    %1407 = vmatpush1.bf16.msra.mxu0 %v1394
    %1408 = vmatprep.subr.bf16.mxu0 0
    %1409 = vmatpush1.bf16.msra.mxu0 %v1393
    %1410 = vmatprep.subr.bf16.mxu0 0
    %1411 = vmatpush1.bf16.msra.mxu0 %v1392
    %1412 = vmatprep.subr.bf16.mxu0 0
    %1413 = vmatpush1.bf16.msra.mxu0 %v1391
    %1414 = vmatprep.subr.bf16.mxu0 0
    %1415 = vmatpush1.bf16.msra.mxu0 %v1390
    %1416 = vmatprep.subr.bf16.mxu0 0
    %1417 = vmatpush1.bf16.msra.mxu0 %v1389
    %1418 = vmatprep.subr.bf16.mxu0 0
    %1419 = vmatpush1.bf16.msra.mxu0 %v1388
    %1420 = vmatprep.subr.bf16.mxu0 0
    %1421 = vmatpush2.bf16.msra.mxu0 0
    %1422 = vmatprep.subr.bf16.mxu0 0
    %1423 = vmatpush2.bf16.msra.mxu0 0
    %1424 = vmatprep.subr.bf16.mxu0 0
    %1425 = vmatpush2.bf16.msra.mxu0 0
    %1426 = vmatprep.subr.bf16.mxu0 0
    %1427 = vmatpush2.bf16.msra.mxu0 0
    %1428 = vmatprep.subr.bf16.mxu0 0
    %1429 = vmatpush2.bf16.msra.mxu0 0
    %1430 = vmatprep.subr.bf16.mxu0 0
    %1431 = vmatpush2.bf16.msra.mxu0 0
    %1432 = vmatprep.subr.bf16.mxu0 0
    %1433 = vmatpush2.bf16.msra.mxu0 0
    %1434 = vmatprep.subr.bf16.mxu0 0
    %1435 = vmatpush2.bf16.msra.mxu0 0
    %1436 = vmatprep.mubr.bf16.mxu0 0
    %1437 = vmatmul.mubr.bf16.gmra.mxu0 %v1329
    %v1438 = vpop.f32.mrf.mxu0
    %v1439 = vadd.f32 %v1354, %v1438
    %v1440 = vpop.f32.mrf.mxu0
    %v1441 = vpop.f32.mrf.mxu0
    %v1442 = vadd.f32 %v1354, %v1441
    %v1443 = vpop.f32.mrf.mxu0
    %1444 = vmatprep.mubr.bf16.mxu0 0
    %1445 = vmatmul.mubr.bf16.gmra.mxu0 %v1330
    %v1446 = vpop.f32.mrf.mxu0
    %v1447 = vadd.f32 %v1354, %v1446
    %v1448 = vpop.f32.mrf.mxu0
    %v1449 = vpop.f32.mrf.mxu0
    %v1450 = vadd.f32 %v1354, %v1449
    %v1451 = vpop.f32.mrf.mxu0
    %1452 = vmatprep.mubr.bf16.mxu0 0
    %1453 = vmatmul.mubr.bf16.gmra.mxu0 %v1331
    %v1454 = vpop.f32.mrf.mxu0
    %v1455 = vadd.f32 %v1354, %v1454
    %v1456 = vpop.f32.mrf.mxu0
    %v1457 = vpop.f32.mrf.mxu0
    %v1458 = vadd.f32 %v1354, %v1457
    %v1459 = vpop.f32.mrf.mxu0
    %1460 = vmatprep.mubr.bf16.mxu0 0
    %1461 = vmatmul.mubr.bf16.gmra.mxu0 %v1332
    %v1462 = vpop.f32.mrf.mxu0
    %v1463 = vadd.f32 %v1354, %v1462
    %v1464 = vpop.f32.mrf.mxu0
    %v1465 = vpop.f32.mrf.mxu0
    %v1466 = vadd.f32 %v1354, %v1465
    %v1467 = vpop.f32.mrf.mxu0
    %1468 = vdwg.mxu0
    %vm1469 = vcmask 39936
    %1470 = vst.msk [vmem:[%s8] sm:$0xff] %vm1469, %v1439
    %1471 = vst.msk [vmem:[%s8 + $0x8] sm:$0xff] %vm1469, %v1442
    %1472 = vst.msk [vmem:[%s8 + $0x10] sm:$0xff] %vm1469, %v1447
    %1473 = vst.msk [vmem:[%s8 + $0x18] sm:$0xff] %vm1469, %v1450
    %1474 = vst.msk [vmem:[%s8 + $0x20] sm:$0xff] %vm1469, %v1455
    %1475 = vst.msk [vmem:[%s8 + $0x28] sm:$0xff] %vm1469, %v1458
    %1476 = vst.msk [vmem:[%s8 + $0x30] sm:$0xff] %vm1469, %v1463
    %1477 = vst.msk [vmem:[%s8 + $0x38] sm:$0xff] %vm1469, %v1466
    // Predicated region
    $region38: #{tpu_custom_call.1} parent=1 // pred_check
      _
    $region39: #{tpu_custom_call.1} parent=1 // pred_check_branch
      %1479 = sbr.rel (0) target = $region41
    $region40: #{tpu_custom_call.1} parent=1 // pred_region
      _
    $region41: #{tpu_custom_call.1} parent=1 // pred_fallthru
      _
    // Predicated region
    $region42: #{tpu_custom_call.1} parent=1 // pred_check
      _
    $region43: #{tpu_custom_call.1} parent=1 // pred_check_branch
      %1481 = sbr.rel (0) target = $region45
    $region44: #{tpu_custom_call.1} parent=1 // pred_region
      %s1483 = ssub.s32 1024, 1024
      %1484 = vsyncadd [#allocation5], %s1483
      %s1485 = sshll.u32 [#allocation6], 4
      %s1486 = int_to_ptr.vmem [resolvable:$true] %s1485
      %1491 = dma.vmem_to_hbm [thread:$0]  %s1486, 1024, %s9, [#allocation5], 128, 128, 8
    $region45: #{tpu_custom_call.1} parent=1 // pred_fallthru
      _
    // Predicated region
    $region46: #{tpu_custom_call.1} parent=1 // pred_check
      _
    $region47: #{tpu_custom_call.1} parent=1 // pred_check_branch
      %1493 = sbr.rel (0) target = $region49
    $region48: #{tpu_custom_call.1} parent=1 // pred_region
      _
    $region49: #{tpu_custom_call.1} parent=1 // pred_fallthru
      _
    // Predicated region
    $region50: #{tpu_custom_call.1} parent=1 // pred_check
      _
    $region51: #{tpu_custom_call.1} parent=1 // pred_check_branch
      %1495 = sbr.rel (0) target = $region53
    $region52: #{tpu_custom_call.1} parent=1 // pred_region
      %1496 = dma.done [#allocation5], 1024
    $region53: #{tpu_custom_call.1} parent=1 // pred_fallthru
      _
    %1497 = vsyncpa [#allocation4], 1
    %1498 = vsyncpa [#allocation5], 1

</llo_original>
